<compile_context>
chip_gen: v7x
topology: tpu7x:2x2x1
jax: 0.10.0
libtpu: 0.0.40
codegen_flags: <defaults>
</compile_context>

<pallas_src>
import functools

import jax
import jax.numpy as jnp
from jax import lax
from jax.experimental import pallas as pl
from jax.experimental.pallas import tpu as pltpu

LANE = 128


# ----------------------------------------------------------------------------
# Small helpers (weight folding / padding)
# ----------------------------------------------------------------------------
def _round_up(x, m):
    return (x + m - 1) // m * m


def _pad_axis(a, axis, target):
    if a.shape[axis] == target:
        return a
    pad = [(0, 0)] * a.ndim
    pad[axis] = (0, target - a.shape[axis])
    return jnp.pad(a, pad)


def _fold_bn(w, bn, eps=1e-5):
    """Fold BN scale into conv weight (out-channel axis last); bf16 weight + f32 bias."""
    gamma, beta, mean, var = bn
    scale = gamma / jnp.sqrt(var + eps)
    bias = beta - mean * scale
    return (w * scale).astype(jnp.bfloat16), bias.astype(jnp.float32)


def _prepare_params(p, needs_proj):
    w1, b1 = _fold_bn(p["w1"], p["bn1"])
    w2, b2 = _fold_bn(p["w2"], p["bn2"])
    if needs_proj:
        wsc, bsc = _fold_bn(p["wsc"], p["bnsc"])
    else:
        wsc, bsc = None, None
    return w1, b1, w2, b2, wsc, bsc


# ----------------------------------------------------------------------------
# Kernel: one batch element per grid step.
#   x_ref is the stride-phase-split, spatially padded input:
#       x_ref[ph, pw, q, qw, c] == x_padded[s*q + ph, s*qw + pw, c]
#   so every 3x3 tap (and the shortcut) is a contiguous static slice.
# ----------------------------------------------------------------------------
def _basic_block_kernel(x_ref, w1_ref, b1_ref, w2_ref, b2_ref, *rest,
                        stride, Ho, Wo, C1, C2, needs_proj):
    if needs_proj:
        wsc_ref, bsc_ref, out_ref = rest
    else:
        (out_ref,) = rest
    s = stride

    # ---- conv1 (+ folded BN1 scale): one bf16 matmul, K = 9*C1 ----
    taps1 = []
    for kh in range(3):
        for kw in range(3):
            taps1.append(x_ref[kh % s, kw % s,
                               kh // s: kh // s + Ho,
                               kw // s: kw // s + Wo, :])
    p1 = jnp.concatenate(taps1, axis=-1).reshape(Ho * Wo, 9 * C1)
    acc1 = jnp.dot(p1, w1_ref[...], preferred_element_type=jnp.float32)
    y1 = jnp.maximum(acc1 + b1_ref[...], 0.0)                      # BN1 bias + ReLU
    y1 = y1.reshape(Ho, Wo, C2).astype(jnp.bfloat16)

    # ---- zero-pad conv1 output (padding=1) as a value (no VMEM scratch) ----
    zr = jnp.zeros((1, Wo, C2), jnp.bfloat16)
    zc = jnp.zeros((Ho + 2, 1, C2), jnp.bfloat16)
    y1p = jnp.concatenate([zr, y1, zr], axis=0)
    y1p = jnp.concatenate([zc, y1p, zc], axis=1)                   # (Ho+2, Wo+2, C2)

    # ---- conv2 (+ folded BN2 scale): one bf16 matmul, K = 9*C2 ----
    taps2 = [y1p[kh:kh + Ho, kw:kw + Wo, :]
             for kh in range(3) for kw in range(3)]
    p2 = jnp.concatenate(taps2, axis=-1).reshape(Ho * Wo, 9 * C2)
    out2 = jnp.dot(p2, w2_ref[...], preferred_element_type=jnp.float32)
    out2 = out2 + b2_ref[...]                                      # BN2 bias

    # ---- shortcut branch (center tap of the padded input) ----
    xs = x_ref[1 % s, 1 % s, 1 // s: 1 // s + Ho, 1 // s: 1 // s + Wo, :]
    xs = xs.reshape(Ho * Wo, C1)
    if needs_proj:
        sc = jnp.dot(xs, wsc_ref[...], preferred_element_type=jnp.float32)
        sc = sc + bsc_ref[...]
    else:
        sc = xs.astype(jnp.float32)                                # C1 == C2 here

    out = jnp.maximum(out2 + sc, 0.0)
    out_ref[...] = out.reshape(Ho, Wo, C2).astype(out_ref.dtype)


# ----------------------------------------------------------------------------
# Wrapper
# ----------------------------------------------------------------------------
def basic_block(x_nchw, p, *, stride):
    N, Cin, H, W = x_nchw.shape
    Cout = p["w1"].shape[-1]
    needs_proj = (stride != 1) or (Cin != Cout)
    s = stride
    Ho = (H - 1) // s + 1
    Wo = (W - 1) // s + 1
    C1 = _round_up(Cin, LANE)
    C2 = _round_up(Cout, LANE)

    w1, b1, w2, b2, wsc, bsc = _prepare_params(p, needs_proj)

    # Channel-pad weights/biases; fuse the 3x3 taps into the contraction dim.
    w1p = _pad_axis(_pad_axis(w1, 2, C1), 3, C2).reshape(9 * C1, C2)
    w2p = _pad_axis(_pad_axis(w2, 2, C2), 3, C2).reshape(9 * C2, C2)
    b1p = _pad_axis(b1, 0, C2).reshape(1, C2)
    b2p = _pad_axis(b2, 0, C2).reshape(1, C2)

    # Activations: NCHW -> NHWC (bf16), channel pad to 128, halo pad (=1),
    # then stride-phase split so the kernel only needs contiguous slices.
    x = jnp.transpose(x_nchw, (0, 2, 3, 1)).astype(jnp.bfloat16)
    x = _pad_axis(x, 3, C1)
    Hp, Wp = H + 2, W + 2
    Hs, Ws = -(-Hp // s), -(-Wp // s)
    xp = jnp.pad(x, ((0, 0), (1, 1 + Hs * s - Hp), (1, 1 + Ws * s - Wp), (0, 0)))
    xph = xp.reshape(N, Hs, s, Ws, s, C1).transpose(0, 2, 4, 1, 3, 5)

    in_specs = [
        pl.BlockSpec((None, s, s, Hs, Ws, C1), lambda n: (n, 0, 0, 0, 0, 0)),
        pl.BlockSpec((9 * C1, C2), lambda n: (0, 0)),   # w1 (taps folded into K)
        pl.BlockSpec((1, C2), lambda n: (0, 0)),        # bn1 bias
        pl.BlockSpec((9 * C2, C2), lambda n: (0, 0)),   # w2
        pl.BlockSpec((1, C2), lambda n: (0, 0)),        # bn2 bias
    ]
    args = [xph, w1p, b1p, w2p, b2p]
    if needs_proj:
        wscp = _pad_axis(_pad_axis(wsc, 0, C1), 1, C2)
        bscp = _pad_axis(bsc, 0, C2).reshape(1, C2)
        in_specs += [pl.BlockSpec((C1, C2), lambda n: (0, 0)),
                     pl.BlockSpec((1, C2), lambda n: (0, 0))]
        args += [wscp, bscp]

    kernel = functools.partial(_basic_block_kernel, stride=s, Ho=Ho, Wo=Wo,
                               C1=C1, C2=C2, needs_proj=needs_proj)

    out = pl.pallas_call(
        kernel,
        out_shape=jax.ShapeDtypeStruct((N, Ho, Wo, C2), jnp.float32),
        grid=(N,),
        in_specs=in_specs,
        out_specs=pl.BlockSpec((None, Ho, Wo, C2), lambda n: (n, 0, 0, 0)),
        compiler_params=pltpu.CompilerParams(dimension_semantics=("parallel",)),
    )(*args)

    # Drop channel padding, NHWC -> NCHW (PyTorch layout).
    return jnp.transpose(out[..., :Cout], (0, 3, 1, 2))


# ----------------------------------------------------------------------------
# Pure-JAX reference (same folded-BN, bf16-operand / f32-accumulate semantics).
# ----------------------------------------------------------------------------
def reference(x_nchw, p, stride):
    Cin = x_nchw.shape[1]
    Cout = p["w1"].shape[-1]
    needs_proj = (stride != 1) or (Cin != Cout)
    w1, b1, w2, b2, wsc, bsc = _prepare_params(p, needs_proj)
    dn = ("NHWC", "HWIO", "NHWC")
    x = jnp.transpose(x_nchw, (0, 2, 3, 1)).astype(jnp.bfloat16)
    y = lax.conv_general_dilated(x, w1, (stride, stride), ((1, 1), (1, 1)),
                                 dimension_numbers=dn,
                                 preferred_element_type=jnp.float32)
    y = jnp.maximum(y + b1, 0.0).astype(jnp.bfloat16)
    y2 = lax.conv_general_dilated(y, w2, (1, 1), ((1, 1), (1, 1)),
                                  dimension_numbers=dn,
                                  preferred_element_type=jnp.float32) + b2
    if needs_proj:
        sc = lax.conv_general_dilated(x, wsc[None, None], (stride, stride),
                                      ((0, 0), (0, 0)), dimension_numbers=dn,
                                      preferred_element_type=jnp.float32) + bsc
    else:
        sc = x.astype(jnp.float32)
    out = jnp.maximum(y2 + sc, 0.0)
    return jnp.transpose(out, (0, 3, 1, 2))


# ----------------------------------------------------------------------------
# Self-test
# ----------------------------------------------------------------------------
def _bn_params(k, C):
    k1, k2, k3, k4 = jax.random.split(k, 4)
    gamma = jax.random.uniform(k1, (C,), minval=0.5, maxval=1.5)
    beta = 0.1 * jax.random.normal(k2, (C,))
    mean = 0.1 * jax.random.normal(k3, (C,))
    var = jax.random.uniform(k4, (C,), minval=0.5, maxval=1.5)
    return (gamma, beta, mean, var)


def _make_params(key, Cin, Cout, needs_proj):
    keys = jax.random.split(key, 6)
    p = {
        "w1": 0.1 * jax.random.normal(keys[0], (3, 3, Cin, Cout), jnp.float32),
        "bn1": _bn_params(keys[1], Cout),
        "w2": 0.1 * jax.random.normal(keys[2], (3, 3, Cout, Cout), jnp.float32),
        "bn2": _bn_params(keys[3], Cout),
    }
    if needs_proj:
        p["wsc"] = 0.1 * jax.random.normal(keys[4], (Cin, Cout), jnp.float32)
        p["bnsc"] = _bn_params(keys[5], Cout)
    return p


if __name__ == "__main__":
    key = jax.random.PRNGKey(0)
    kx1, kp1, kx2, kp2 = jax.random.split(key, 4)

    # 1) Projection shortcut: stride=2, Cin=4 -> Cout=8.
    N, Cin, H, W, Cout, stride = 2, 4, 16, 16, 8, 2
    x = jax.random.normal(kx1, (N, Cin, H, W), jnp.float32)
    params = _make_params(kp1, Cin, Cout, needs_proj=True)
    out = basic_block(x, params, stride=stride)
    jax.block_until_ready(out)
    ref = reference(x, params, stride)
    assert out.shape == ref.shape == (N, Cout, (H - 1) // stride + 1, (W - 1) // stride + 1)
    assert jnp.allclose(out, ref, atol=1e-2, rtol=1e-2), "projection-path mismatch vs reference"

    # 2) Identity shortcut: stride=1, Cin == Cout.
    N, Cin, H, W, Cout, stride = 2, 8, 16, 16, 8, 1
    x2 = jax.random.normal(kx2, (N, Cin, H, W), jnp.float32)
    params2 = _make_params(kp2, Cin, Cout, needs_proj=False)
    out2 = basic_block(x2, params2, stride=stride)
    jax.block_until_ready(out2)
    ref2 = reference(x2, params2, stride)
    assert out2.shape == ref2.shape == (N, Cout, H, W)
    assert jnp.allclose(out2, ref2, atol=1e-2, rtol=1e-2), "identity-path mismatch vs reference"

    print("KERNEL_OK")
</pallas_src>

<mosaic_0001>
module attributes {stable_mosaic.version = 11 : i64} {
  func.func @_basic_block_kernel(%arg0: i32, %arg1: memref<1x2x2x9x9x128xbf16, #tpu.memory_space<vmem>>, %arg2: memref<1152x128xbf16, #tpu.memory_space<vmem>>, %arg3: memref<1x128xf32, #tpu.memory_space<vmem>>, %arg4: memref<1152x128xbf16, #tpu.memory_space<vmem>>, %arg5: memref<1x128xf32, #tpu.memory_space<vmem>>, %arg6: memref<128x128xbf16, #tpu.memory_space<vmem>>, %arg7: memref<1x128xf32, #tpu.memory_space<vmem>>, %arg8: memref<1x8x8x128xf32, #tpu.memory_space<vmem>>) attributes {dimension_semantics = [#tpu.dimension_semantics<parallel>], iteration_bounds = array<i64: 2>, scalar_prefetch = 0 : i64, scratch_operands = 0 : i64, tpu.core_type = #tpu.core_type<tc>, window_params = [{transform_indices = @transform_0, window_bounds = array<i64: 1, 2, 2, 9, 9, 128>}, {pipeline_mode = #tpu.pipeline_mode<synchronous>, transform_indices = @transform_1, window_bounds = array<i64: 1152, 128>}, {pipeline_mode = #tpu.pipeline_mode<synchronous>, transform_indices = @transform_2, window_bounds = array<i64: 1, 128>}, {pipeline_mode = #tpu.pipeline_mode<synchronous>, transform_indices = @transform_3, window_bounds = array<i64: 1152, 128>}, {pipeline_mode = #tpu.pipeline_mode<synchronous>, transform_indices = @transform_4, window_bounds = array<i64: 1, 128>}, {pipeline_mode = #tpu.pipeline_mode<synchronous>, transform_indices = @transform_5, window_bounds = array<i64: 128, 128>}, {pipeline_mode = #tpu.pipeline_mode<synchronous>, transform_indices = @transform_6, window_bounds = array<i64: 1, 128>}, {transform_indices = @transform_7, window_bounds = array<i64: 1, 8, 8, 128>}]} {
    %c0 = arith.constant 0 : index
    %c0_0 = arith.constant 0 : index
    %c0_1 = arith.constant 0 : index
    %c0_2 = arith.constant 0 : index
    %c0_3 = arith.constant 0 : index
    %c0_4 = arith.constant 0 : index
    %0 = vector.load %arg1[%c0, %c0_0, %c0_1, %c0_2, %c0_3, %c0_4] : memref<1x2x2x9x9x128xbf16, #tpu.memory_space<vmem>>, vector<1x1x1x8x8x128xbf16>
    %1 = vector.shape_cast %0 : vector<1x1x1x8x8x128xbf16> to vector<8x8x128xbf16>
    %c0_5 = arith.constant 0 : index
    %c0_6 = arith.constant 0 : index
    %c1 = arith.constant 1 : index
    %c0_7 = arith.constant 0 : index
    %c0_8 = arith.constant 0 : index
    %c0_9 = arith.constant 0 : index
    %2 = vector.load %arg1[%c0_5, %c0_6, %c1, %c0_7, %c0_8, %c0_9] : memref<1x2x2x9x9x128xbf16, #tpu.memory_space<vmem>>, vector<1x1x1x8x8x128xbf16>
    %3 = vector.shape_cast %2 : vector<1x1x1x8x8x128xbf16> to vector<8x8x128xbf16>
    %c0_10 = arith.constant 0 : index
    %c0_11 = arith.constant 0 : index
    %c0_12 = arith.constant 0 : index
    %c0_13 = arith.constant 0 : index
    %c1_14 = arith.constant 1 : index
    %c0_15 = arith.constant 0 : index
    %4 = vector.load %arg1[%c0_10, %c0_11, %c0_12, %c0_13, %c1_14, %c0_15] : memref<1x2x2x9x9x128xbf16, #tpu.memory_space<vmem>>, vector<1x1x1x8x8x128xbf16>
    %5 = vector.shape_cast %4 : vector<1x1x1x8x8x128xbf16> to vector<8x8x128xbf16>
    %c0_16 = arith.constant 0 : index
    %c1_17 = arith.constant 1 : index
    %c0_18 = arith.constant 0 : index
    %c0_19 = arith.constant 0 : index
    %c0_20 = arith.constant 0 : index
    %c0_21 = arith.constant 0 : index
    %6 = vector.load %arg1[%c0_16, %c1_17, %c0_18, %c0_19, %c0_20, %c0_21] : memref<1x2x2x9x9x128xbf16, #tpu.memory_space<vmem>>, vector<1x1x1x8x8x128xbf16>
    %7 = vector.shape_cast %6 : vector<1x1x1x8x8x128xbf16> to vector<8x8x128xbf16>
    %c0_22 = arith.constant 0 : index
    %c1_23 = arith.constant 1 : index
    %c1_24 = arith.constant 1 : index
    %c0_25 = arith.constant 0 : index
    %c0_26 = arith.constant 0 : index
    %c0_27 = arith.constant 0 : index
    %8 = vector.load %arg1[%c0_22, %c1_23, %c1_24, %c0_25, %c0_26, %c0_27] : memref<1x2x2x9x9x128xbf16, #tpu.memory_space<vmem>>, vector<1x1x1x8x8x128xbf16>
    %9 = vector.shape_cast %8 : vector<1x1x1x8x8x128xbf16> to vector<8x8x128xbf16>
    %c0_28 = arith.constant 0 : index
    %c1_29 = arith.constant 1 : index
    %c0_30 = arith.constant 0 : index
    %c0_31 = arith.constant 0 : index
    %c1_32 = arith.constant 1 : index
    %c0_33 = arith.constant 0 : index
    %10 = vector.load %arg1[%c0_28, %c1_29, %c0_30, %c0_31, %c1_32, %c0_33] : memref<1x2x2x9x9x128xbf16, #tpu.memory_space<vmem>>, vector<1x1x1x8x8x128xbf16>
    %11 = vector.shape_cast %10 : vector<1x1x1x8x8x128xbf16> to vector<8x8x128xbf16>
    %c0_34 = arith.constant 0 : index
    %c0_35 = arith.constant 0 : index
    %c0_36 = arith.constant 0 : index
    %c1_37 = arith.constant 1 : index
    %c0_38 = arith.constant 0 : index
    %c0_39 = arith.constant 0 : index
    %12 = vector.load %arg1[%c0_34, %c0_35, %c0_36, %c1_37, %c0_38, %c0_39] : memref<1x2x2x9x9x128xbf16, #tpu.memory_space<vmem>>, vector<1x1x1x8x8x128xbf16>
    %13 = vector.shape_cast %12 : vector<1x1x1x8x8x128xbf16> to vector<8x8x128xbf16>
    %c0_40 = arith.constant 0 : index
    %c0_41 = arith.constant 0 : index
    %c1_42 = arith.constant 1 : index
    %c1_43 = arith.constant 1 : index
    %c0_44 = arith.constant 0 : index
    %c0_45 = arith.constant 0 : index
    %14 = vector.load %arg1[%c0_40, %c0_41, %c1_42, %c1_43, %c0_44, %c0_45] : memref<1x2x2x9x9x128xbf16, #tpu.memory_space<vmem>>, vector<1x1x1x8x8x128xbf16>
    %15 = vector.shape_cast %14 : vector<1x1x1x8x8x128xbf16> to vector<8x8x128xbf16>
    %c0_46 = arith.constant 0 : index
    %c0_47 = arith.constant 0 : index
    %c0_48 = arith.constant 0 : index
    %c1_49 = arith.constant 1 : index
    %c1_50 = arith.constant 1 : index
    %c0_51 = arith.constant 0 : index
    %16 = vector.load %arg1[%c0_46, %c0_47, %c0_48, %c1_49, %c1_50, %c0_51] : memref<1x2x2x9x9x128xbf16, #tpu.memory_space<vmem>>, vector<1x1x1x8x8x128xbf16>
    %17 = vector.shape_cast %16 : vector<1x1x1x8x8x128xbf16> to vector<8x8x128xbf16>
    %18 = tpu.concatenate %1, %3, %5, %7, %9, %11, %13, %15, %17 in 2 : vector<8x8x128xbf16>, vector<8x8x128xbf16>, vector<8x8x128xbf16>, vector<8x8x128xbf16>, vector<8x8x128xbf16>, vector<8x8x128xbf16>, vector<8x8x128xbf16>, vector<8x8x128xbf16>, vector<8x8x128xbf16> -> vector<8x8x1152xbf16>
    %19 = vector.shape_cast %18 : vector<8x8x1152xbf16> to vector<64x1152xbf16>
    %c0_52 = arith.constant 0 : index
    %c0_53 = arith.constant 0 : index
    %20 = vector.load %arg2[%c0_52, %c0_53] : memref<1152x128xbf16, #tpu.memory_space<vmem>>, vector<1152x128xbf16>
    %cst = arith.constant dense<0.000000e+00> : vector<64x128xf32>
    %21 = tpu.matmul %19, %20, %cst {dimension_numbers = #tpu.dot_dimension_numbers<[1], [0], [0], [1], [0, 0, 1, 1], [], []>} : vector<64x1152xbf16>, vector<1152x128xbf16>, vector<64x128xf32> -> vector<64x128xf32>
    %c0_54 = arith.constant 0 : index
    %c0_55 = arith.constant 0 : index
    %22 = vector.load %arg3[%c0_54, %c0_55] : memref<1x128xf32, #tpu.memory_space<vmem>>, vector<1x128xf32>
    %23 = vector.broadcast %22 : vector<1x128xf32> to vector<64x128xf32>
    %24 = arith.addf %21, %23 : vector<64x128xf32>
    %cst_56 = arith.constant 0.000000e+00 : f32
    %25 = vector.broadcast %cst_56 : f32 to vector<64x128xf32>
    %26 = arith.maximumf %24, %25 : vector<64x128xf32>
    %27 = vector.shape_cast %26 : vector<64x128xf32> to vector<8x8x128xf32>
    %28 = arith.truncf %27 : vector<8x8x128xf32> to vector<8x8x128xbf16>
    %cst_57 = arith.constant 0.000000e+00 : bf16
    %29 = vector.broadcast %cst_57 : bf16 to vector<1x8x128xbf16>
    %cst_58 = arith.constant 0.000000e+00 : bf16
    %30 = vector.broadcast %cst_58 : bf16 to vector<10x1x128xbf16>
    %31 = tpu.concatenate %29, %28, %29 in 0 : vector<1x8x128xbf16>, vector<8x8x128xbf16>, vector<1x8x128xbf16> -> vector<10x8x128xbf16>
    %32 = tpu.concatenate %30, %31, %30 in 1 : vector<10x1x128xbf16>, vector<10x8x128xbf16>, vector<10x1x128xbf16> -> vector<10x10x128xbf16>
    %33 = vector.extract_strided_slice %32 {offsets = [0, 0, 0], sizes = [8, 8, 128], strides = [1, 1, 1]} : vector<10x10x128xbf16> to vector<8x8x128xbf16>
    %34 = vector.extract_strided_slice %32 {offsets = [0, 1, 0], sizes = [8, 8, 128], strides = [1, 1, 1]} : vector<10x10x128xbf16> to vector<8x8x128xbf16>
    %35 = vector.extract_strided_slice %32 {offsets = [0, 2, 0], sizes = [8, 8, 128], strides = [1, 1, 1]} : vector<10x10x128xbf16> to vector<8x8x128xbf16>
    %36 = vector.extract_strided_slice %32 {offsets = [1, 0, 0], sizes = [8, 8, 128], strides = [1, 1, 1]} : vector<10x10x128xbf16> to vector<8x8x128xbf16>
    %37 = vector.extract_strided_slice %32 {offsets = [1, 1, 0], sizes = [8, 8, 128], strides = [1, 1, 1]} : vector<10x10x128xbf16> to vector<8x8x128xbf16>
    %38 = vector.extract_strided_slice %32 {offsets = [1, 2, 0], sizes = [8, 8, 128], strides = [1, 1, 1]} : vector<10x10x128xbf16> to vector<8x8x128xbf16>
    %39 = vector.extract_strided_slice %32 {offsets = [2, 0, 0], sizes = [8, 8, 128], strides = [1, 1, 1]} : vector<10x10x128xbf16> to vector<8x8x128xbf16>
    %40 = vector.extract_strided_slice %32 {offsets = [2, 1, 0], sizes = [8, 8, 128], strides = [1, 1, 1]} : vector<10x10x128xbf16> to vector<8x8x128xbf16>
    %41 = vector.extract_strided_slice %32 {offsets = [2, 2, 0], sizes = [8, 8, 128], strides = [1, 1, 1]} : vector<10x10x128xbf16> to vector<8x8x128xbf16>
    %42 = tpu.concatenate %33, %34, %35, %36, %37, %38, %39, %40, %41 in 2 : vector<8x8x128xbf16>, vector<8x8x128xbf16>, vector<8x8x128xbf16>, vector<8x8x128xbf16>, vector<8x8x128xbf16>, vector<8x8x128xbf16>, vector<8x8x128xbf16>, vector<8x8x128xbf16>, vector<8x8x128xbf16> -> vector<8x8x1152xbf16>
    %43 = vector.shape_cast %42 : vector<8x8x1152xbf16> to vector<64x1152xbf16>
    %c0_59 = arith.constant 0 : index
    %c0_60 = arith.constant 0 : index
    %44 = vector.load %arg4[%c0_59, %c0_60] : memref<1152x128xbf16, #tpu.memory_space<vmem>>, vector<1152x128xbf16>
    %cst_61 = arith.constant dense<0.000000e+00> : vector<64x128xf32>
    %45 = tpu.matmul %43, %44, %cst_61 {dimension_numbers = #tpu.dot_dimension_numbers<[1], [0], [0], [1], [0, 0, 1, 1], [], []>} : vector<64x1152xbf16>, vector<1152x128xbf16>, vector<64x128xf32> -> vector<64x128xf32>
    %c0_62 = arith.constant 0 : index
    %c0_63 = arith.constant 0 : index
    %46 = vector.load %arg5[%c0_62, %c0_63] : memref<1x128xf32, #tpu.memory_space<vmem>>, vector<1x128xf32>
    %47 = vector.broadcast %46 : vector<1x128xf32> to vector<64x128xf32>
    %48 = arith.addf %45, %47 : vector<64x128xf32>
    %c0_64 = arith.constant 0 : index
    %c1_65 = arith.constant 1 : index
    %c1_66 = arith.constant 1 : index
    %c0_67 = arith.constant 0 : index
    %c0_68 = arith.constant 0 : index
    %c0_69 = arith.constant 0 : index
    %49 = vector.load %arg1[%c0_64, %c1_65, %c1_66, %c0_67, %c0_68, %c0_69] : memref<1x2x2x9x9x128xbf16, #tpu.memory_space<vmem>>, vector<1x1x1x8x8x128xbf16>
    %50 = vector.shape_cast %49 : vector<1x1x1x8x8x128xbf16> to vector<8x8x128xbf16>
    %51 = vector.shape_cast %50 : vector<8x8x128xbf16> to vector<64x128xbf16>
    %c0_70 = arith.constant 0 : index
    %c0_71 = arith.constant 0 : index
    %52 = vector.load %arg6[%c0_70, %c0_71] : memref<128x128xbf16, #tpu.memory_space<vmem>>, vector<128x128xbf16>
    %cst_72 = arith.constant dense<0.000000e+00> : vector<64x128xf32>
    %53 = tpu.matmul %51, %52, %cst_72 {dimension_numbers = #tpu.dot_dimension_numbers<[1], [0], [0], [1], [0, 0, 1, 1], [], []>} : vector<64x128xbf16>, vector<128x128xbf16>, vector<64x128xf32> -> vector<64x128xf32>
    %c0_73 = arith.constant 0 : index
    %c0_74 = arith.constant 0 : index
    %54 = vector.load %arg7[%c0_73, %c0_74] : memref<1x128xf32, #tpu.memory_space<vmem>>, vector<1x128xf32>
    %55 = vector.broadcast %54 : vector<1x128xf32> to vector<64x128xf32>
    %56 = arith.addf %53, %55 : vector<64x128xf32>
    %57 = arith.addf %48, %56 : vector<64x128xf32>
    %cst_75 = arith.constant 0.000000e+00 : f32
    %58 = vector.broadcast %cst_75 : f32 to vector<64x128xf32>
    %59 = arith.maximumf %57, %58 : vector<64x128xf32>
    %60 = vector.shape_cast %59 : vector<64x128xf32> to vector<8x8x128xf32>
    %c0_76 = arith.constant 0 : index
    %c0_77 = arith.constant 0 : index
    %c0_78 = arith.constant 0 : index
    %c0_79 = arith.constant 0 : index
    %61 = vector.load %arg8[%c0_76, %c0_77, %c0_78, %c0_79] : memref<1x8x8x128xf32, #tpu.memory_space<vmem>>, vector<1x8x8x128xf32>
    %62 = vector.shape_cast %61 : vector<1x8x8x128xf32> to vector<8x8x128xf32>
    %63 = vector.shape_cast %60 : vector<8x8x128xf32> to vector<1x8x8x128xf32>
    tpu.vector_store %arg8[%c0_76, %c0_77, %c0_78, %c0_79], %63 {strides = array<i32>} : memref<1x8x8x128xf32, #tpu.memory_space<vmem>>, vector<1x8x8x128xf32>,
    return
  }
  func.func @transform_0(%arg0: i32) -> (i32, i32, i32, i32, i32, i32) {
    %c0_i32 = arith.constant 0 : i32
    %c0_i32_0 = arith.constant 0 : i32
    %c0_i32_1 = arith.constant 0 : i32
    %c0_i32_2 = arith.constant 0 : i32
    %c0_i32_3 = arith.constant 0 : i32
    %c0_i32_4 = arith.constant 0 : i32
    return %arg0, %c0_i32, %c0_i32_0, %c0_i32_1, %c0_i32_2, %c0_i32_3 : i32, i32, i32, i32, i32, i32
  }
  func.func @transform_1(%arg0: i32) -> (i32, i32) {
    %c0_i32 = arith.constant 0 : i32
    %c0_i32_0 = arith.constant 0 : i32
    %c0_i32_1 = arith.constant 0 : i32
    return %c0_i32, %c0_i32_0 : i32, i32
  }
  func.func @transform_2(%arg0: i32) -> (i32, i32) {
    %c0_i32 = arith.constant 0 : i32
    %c0_i32_0 = arith.constant 0 : i32
    %c0_i32_1 = arith.constant 0 : i32
    return %c0_i32, %c0_i32_0 : i32, i32
  }
  func.func @transform_3(%arg0: i32) -> (i32, i32) {
    %c0_i32 = arith.constant 0 : i32
    %c0_i32_0 = arith.constant 0 : i32
    %c0_i32_1 = arith.constant 0 : i32
    return %c0_i32, %c0_i32_0 : i32, i32
  }
  func.func @transform_4(%arg0: i32) -> (i32, i32) {
    %c0_i32 = arith.constant 0 : i32
    %c0_i32_0 = arith.constant 0 : i32
    %c0_i32_1 = arith.constant 0 : i32
    return %c0_i32, %c0_i32_0 : i32, i32
  }
  func.func @transform_5(%arg0: i32) -> (i32, i32) {
    %c0_i32 = arith.constant 0 : i32
    %c0_i32_0 = arith.constant 0 : i32
    %c0_i32_1 = arith.constant 0 : i32
    return %c0_i32, %c0_i32_0 : i32, i32
  }
  func.func @transform_6(%arg0: i32) -> (i32, i32) {
    %c0_i32 = arith.constant 0 : i32
    %c0_i32_0 = arith.constant 0 : i32
    %c0_i32_1 = arith.constant 0 : i32
    return %c0_i32, %c0_i32_0 : i32, i32
  }
  func.func @transform_7(%arg0: i32) -> (i32, i32, i32, i32) {
    %c0_i32 = arith.constant 0 : i32
    %c0_i32_0 = arith.constant 0 : i32
    %c0_i32_1 = arith.constant 0 : i32
    %c0_i32_2 = arith.constant 0 : i32
    return %arg0, %c0_i32, %c0_i32_0, %c0_i32_1 : i32, i32, i32, i32
  }
}

</mosaic_0001>

<llo_original>
// kernel: tpu_custom_call.1
$region0: #{tpu_custom_call.1}
  #allocation0 [shape = 'u32[]', space=smem, size = 0x4, offset = 0x4, fixed_abs, tag = 'smem constant byte address 0x4 - core index']
  #allocation1 [shape = 'u32[144,128]{1,0:T(1,128)}', space=vmem, size = 0x12000, scoped, tag = 'internal scratch']
  %s0 = inlined_call_operand.vmem [shape: bf16[2,2,2,9,9,128], index: 0, kind: input, shape index: {}]
  %s1 = inlined_call_operand.vmem [shape: bf16[1152,128], index: 1, kind: input, shape index: {}]
  %s2 = inlined_call_operand.vmem [shape: f32[1,128], index: 2, kind: input, shape index: {}]
  %s3 = inlined_call_operand.hbm [shape: bf16[1152,128], index: 3, kind: input, shape index: {}]
  %s4 = inlined_call_operand.vmem [shape: f32[1,128], index: 4, kind: input, shape index: {}]
  %s5 = inlined_call_operand.vmem [shape: bf16[128,128], index: 5, kind: input, shape index: {}]
  %s6 = inlined_call_operand.vmem [shape: f32[1,128], index: 6, kind: input, shape index: {}]
  %s7 = inlined_call_operand.hbm [shape: f32[2,8,8,128], index: 7, kind: output, shape index: {}]
  %s8 = sld [smem:[#allocation0]]
  $region65: #{tpu_custom_call.1} parent=0
    _
  %s10 = ssub.s32 1, %s8
  %s11 = scalar_select 0, %s10, %s8
  $region1: #{tpu_custom_call.1} parent=0
    #allocation2 [shape = 'u8[294912]{0}', space=vmem, size = 0x48000, scoped, tag = 'input window, operand 3, single buffered']
    #allocation3 [shape = 's32[2]{0}', space=sflag, size = 0x8, scoped, tag = 'scoped memory for tpu_custom_call.1']
    #allocation4 [shape = 's32[2]{0}', space=sflag, size = 0x8, scoped, tag = 'scoped memory for tpu_custom_call.1']
    #allocation5 [shape = 'u8[65536]{0}', space=vmem, size = 0x10000, scoped, tag = 'output window, operand 0']
    %12 = vsyncpa [#allocation3], 0
    %13 = vsyncpa [#allocation4], 0
    %s14 = scalar_lea.sflag [#allocation4], 1
    %15 = vsyncpa %s14, 0
    loop: start=0, step=1, limit=4
    $region2: #{tpu_custom_call.1} parent=1 // loop_pre_header
      _
    $region3: #{tpu_custom_call.1} parent=1 // loop_header
      %s17 = sphi 0, %s21
      %p18 = scmp.ge.s32.totalorder %s17, 4
      %s27 = sphi 0, %s29
      %s30 = sphi 0, %s27
      %s31 = sphi 0, %s30
      %s47 = sphi 0, %s31
      %s51 = sphi 0, %s51
      %s53 = sphi 0, %s51
      %s54 = sphi 0, %s53
      %s68 = sphi 0, %s54
      %s72 = sphi 0, %s72
      %s74 = sphi 0, %s72
      %s75 = sphi 0, %s74
      %s89 = sphi 0, %s75
      %s93 = sphi 0, %s93
      %s95 = sphi 0, %s93
      %s96 = sphi 0, %s95
      %s110 = sphi 0, %s96
      %s114 = sphi 0, %s114
      %s116 = sphi 0, %s114
      %s117 = sphi 0, %s116
      %s131 = sphi 0, %s117
      %s135 = sphi 0, %s135
      %s137 = sphi 0, %s135
      %s138 = sphi 0, %s137
      %s152 = sphi 0, %s138
      %s156 = sphi 0, %s156
      %s158 = sphi 0, %s156
      %s159 = sphi 0, %s158
      %s173 = sphi 0, %s159
      %s179 = sphi 0, %s181
      %s182 = sphi 0, %s179
      %s183 = sphi 0, %s182
      %s199 = sphi 0, %s183
    $region4: #{tpu_custom_call.1} parent=1 // loop_header_branch
      %20 = sbr.rel (%p18) target = $region8
    $region5: #{tpu_custom_call.1} parent=1 // loop_body
      %s22 = ssub.s32 %s17, 1
      %s23 = ssub.s32 %s17, 2
      %s24 = sadd.s32 %s17, 1
      %s25 = ssub.s32 %s17, %s24
      %p26 = scmp.eq.s32.totalorder %s25, 0
      %s28 = sadd.s32 %s27, 1
      %s29 = scalar_select %p26, %s27, %s28
      %p32 = pneg %p26
      %p33 = scmp.eq.s32.totalorder %s17, 1
      %p34 = por %p32, %p33
      %p35 = scmp.ne.s32.totalorder %s27, %s30
      %p36 = scmp.eq.s32.totalorder %s17, 0
      %p37 = por %p35, %p36
      %p38 = scmp.ne.s32.totalorder %s27, %s30
      %p39 = scmp.eq.s32.totalorder %s22, 1
      %p40 = por %p38, %p39
      %p41 = scmp.ne.s32.totalorder %s30, %s31
      %p42 = scmp.eq.s32.totalorder %s22, 0
      %p43 = por %p41, %p42
      %p44 = scmp.ne.s32.totalorder %s30, %s31
      %p45 = scmp.eq.s32.totalorder %s23, 1
      %p46 = por %p44, %p45
      %p48 = scmp.ne.s32.totalorder %s31, %s47
      %p49 = scmp.eq.s32.totalorder %s23, 0
      %p50 = por %p48, %p49
      %s52 = sadd.s32 %s51, 1
      %p55 = scmp.eq.s32.totalorder %s17, 1
      %p56 = scmp.ne.s32.totalorder %s51, %s53
      %p57 = scmp.eq.s32.totalorder %s17, 0
      %p58 = por %p56, %p57
      %p59 = scmp.ne.s32.totalorder %s51, %s53
      %p60 = scmp.eq.s32.totalorder %s22, 1
      %p61 = por %p59, %p60
      %p62 = scmp.ne.s32.totalorder %s53, %s54
      %p63 = scmp.eq.s32.totalorder %s22, 0
      %p64 = por %p62, %p63
      %p65 = scmp.ne.s32.totalorder %s53, %s54
      %p66 = scmp.eq.s32.totalorder %s23, 1
      %p67 = por %p65, %p66
      %p69 = scmp.ne.s32.totalorder %s54, %s68
      %p70 = scmp.eq.s32.totalorder %s23, 0
      %p71 = por %p69, %p70
      %s73 = sadd.s32 %s72, 1
      %p76 = scmp.eq.s32.totalorder %s17, 1
      %p77 = scmp.ne.s32.totalorder %s72, %s74
      %p78 = scmp.eq.s32.totalorder %s17, 0
      %p79 = por %p77, %p78
      %p80 = scmp.ne.s32.totalorder %s72, %s74
      %p81 = scmp.eq.s32.totalorder %s22, 1
      %p82 = por %p80, %p81
      %p83 = scmp.ne.s32.totalorder %s74, %s75
      %p84 = scmp.eq.s32.totalorder %s22, 0
      %p85 = por %p83, %p84
      %p86 = scmp.ne.s32.totalorder %s74, %s75
      %p87 = scmp.eq.s32.totalorder %s23, 1
      %p88 = por %p86, %p87
      %p90 = scmp.ne.s32.totalorder %s75, %s89
      %p91 = scmp.eq.s32.totalorder %s23, 0
      %p92 = por %p90, %p91
      %s94 = sadd.s32 %s93, 1
      %p97 = scmp.eq.s32.totalorder %s17, 1
      %p98 = scmp.ne.s32.totalorder %s93, %s95
      %p99 = scmp.eq.s32.totalorder %s17, 0
      %p100 = por %p98, %p99
      %p101 = scmp.ne.s32.totalorder %s93, %s95
      %p102 = scmp.eq.s32.totalorder %s22, 1
      %p103 = por %p101, %p102
      %p104 = scmp.ne.s32.totalorder %s95, %s96
      %p105 = scmp.eq.s32.totalorder %s22, 0
      %p106 = por %p104, %p105
      %p107 = scmp.ne.s32.totalorder %s95, %s96
      %p108 = scmp.eq.s32.totalorder %s23, 1
      %p109 = por %p107, %p108
      %p111 = scmp.ne.s32.totalorder %s96, %s110
      %p112 = scmp.eq.s32.totalorder %s23, 0
      %p113 = por %p111, %p112
      %s115 = sadd.s32 %s114, 1
      %p118 = scmp.eq.s32.totalorder %s17, 1
      %p119 = scmp.ne.s32.totalorder %s114, %s116
      %p120 = scmp.eq.s32.totalorder %s17, 0
      %p121 = por %p119, %p120
      %p122 = scmp.ne.s32.totalorder %s114, %s116
      %p123 = scmp.eq.s32.totalorder %s22, 1
      %p124 = por %p122, %p123
      %p125 = scmp.ne.s32.totalorder %s116, %s117
      %p126 = scmp.eq.s32.totalorder %s22, 0
      %p127 = por %p125, %p126
      %p128 = scmp.ne.s32.totalorder %s116, %s117
      %p129 = scmp.eq.s32.totalorder %s23, 1
      %p130 = por %p128, %p129
      %p132 = scmp.ne.s32.totalorder %s117, %s131
      %p133 = scmp.eq.s32.totalorder %s23, 0
      %p134 = por %p132, %p133
      %s136 = sadd.s32 %s135, 1
      %p139 = scmp.eq.s32.totalorder %s17, 1
      %p140 = scmp.ne.s32.totalorder %s135, %s137
      %p141 = scmp.eq.s32.totalorder %s17, 0
      %p142 = por %p140, %p141
      %p143 = scmp.ne.s32.totalorder %s135, %s137
      %p144 = scmp.eq.s32.totalorder %s22, 1
      %p145 = por %p143, %p144
      %p146 = scmp.ne.s32.totalorder %s137, %s138
      %p147 = scmp.eq.s32.totalorder %s22, 0
      %p148 = por %p146, %p147
      %p149 = scmp.ne.s32.totalorder %s137, %s138
      %p150 = scmp.eq.s32.totalorder %s23, 1
      %p151 = por %p149, %p150
      %p153 = scmp.ne.s32.totalorder %s138, %s152
      %p154 = scmp.eq.s32.totalorder %s23, 0
      %p155 = por %p153, %p154
      %s157 = sadd.s32 %s156, 1
      %p160 = scmp.eq.s32.totalorder %s17, 1
      %p161 = scmp.ne.s32.totalorder %s156, %s158
      %p162 = scmp.eq.s32.totalorder %s17, 0
      %p163 = por %p161, %p162
      %p164 = scmp.ne.s32.totalorder %s156, %s158
      %p165 = scmp.eq.s32.totalorder %s22, 1
      %p166 = por %p164, %p165
      %p167 = scmp.ne.s32.totalorder %s158, %s159
      %p168 = scmp.eq.s32.totalorder %s22, 0
      %p169 = por %p167, %p168
      %p170 = scmp.ne.s32.totalorder %s158, %s159
      %p171 = scmp.eq.s32.totalorder %s23, 1
      %p172 = por %p170, %p171
      %p174 = scmp.ne.s32.totalorder %s159, %s173
      %p175 = scmp.eq.s32.totalorder %s23, 0
      %p176 = por %p174, %p175
      %s177 = ssub.s32 %s17, %s24
      %p178 = scmp.eq.s32.totalorder %s177, 0
      %s180 = sadd.s32 %s179, 1
      %s181 = scalar_select %p178, %s179, %s180
      %p184 = pneg %p178
      %p185 = scmp.eq.s32.totalorder %s17, 1
      %p186 = por %p184, %p185
      %p187 = scmp.ne.s32.totalorder %s179, %s182
      %p188 = scmp.eq.s32.totalorder %s17, 0
      %p189 = por %p187, %p188
      %p190 = scmp.ne.s32.totalorder %s179, %s182
      %p191 = scmp.eq.s32.totalorder %s22, 1
      %p192 = por %p190, %p191
      %p193 = scmp.ne.s32.totalorder %s182, %s183
      %p194 = scmp.eq.s32.totalorder %s22, 0
      %p195 = por %p193, %p194
      %p196 = scmp.ne.s32.totalorder %s182, %s183
      %p197 = scmp.eq.s32.totalorder %s23, 1
      %p198 = por %p196, %p197
      %p200 = scmp.ne.s32.totalorder %s183, %s199
      %p201 = scmp.eq.s32.totalorder %s23, 0
      %p202 = por %p200, %p201
      %p203 = scmp.le.s32.totalorder 1, %s17
      %p204 = scmp.lt.s32.totalorder %s17, 3
      %p205 = pnand %p203, %p204
      %p206 = pneg %p205
      // Predicated region
      $region9: #{tpu_custom_call.1} parent=5 // pred_check
        _
      $region10: #{tpu_custom_call.1} parent=5 // pred_check_branch
        %208 = sbr.rel (%p205) target = $region12
      $region11: #{tpu_custom_call.1} parent=5 // pred_region
        %s209 = ssub.s32 %s17, 1
        // Predicated region
        $region13: #{tpu_custom_call.1} parent=11 // pred_check
          %p210 = pneg %p64
        $region14: #{tpu_custom_call.1} parent=11 // pred_check_branch
          %212 = sbr.rel (%p210) target = $region16
        $region15: #{tpu_custom_call.1} parent=11 // pred_region
          _
        $region16: #{tpu_custom_call.1} parent=11 // pred_fallthru
          _
        // Predicated region
        $region17: #{tpu_custom_call.1} parent=11 // pred_check
          %p213 = pneg %p85
        $region18: #{tpu_custom_call.1} parent=11 // pred_check_branch
          %215 = sbr.rel (%p213) target = $region20
        $region19: #{tpu_custom_call.1} parent=11 // pred_region
          _
        $region20: #{tpu_custom_call.1} parent=11 // pred_fallthru
          _
        // Predicated region
        $region21: #{tpu_custom_call.1} parent=11 // pred_check
          %p216 = pneg %p106
        $region22: #{tpu_custom_call.1} parent=11 // pred_check_branch
          %218 = sbr.rel (%p216) target = $region24
        $region23: #{tpu_custom_call.1} parent=11 // pred_region
          %s220 = ssub.s32 9216, 9216
          %221 = vsyncadd [#allocation3], %s220
          %s222 = sshll.u32 [#allocation2], 4
          %s223 = int_to_ptr.vmem [resolvable:$true] %s222
          %228 = dma.hbm_to_vmem [thread:$0]  %s3, 9216, %s223, [#allocation3], 64, 64, 4
        $region24: #{tpu_custom_call.1} parent=11 // pred_fallthru
          _
        // Predicated region
        $region25: #{tpu_custom_call.1} parent=11 // pred_check
          %p229 = pneg %p127
        $region26: #{tpu_custom_call.1} parent=11 // pred_check_branch
          %231 = sbr.rel (%p229) target = $region28
        $region27: #{tpu_custom_call.1} parent=11 // pred_region
          _
        $region28: #{tpu_custom_call.1} parent=11 // pred_fallthru
          _
        // Predicated region
        $region29: #{tpu_custom_call.1} parent=11 // pred_check
          %p232 = pneg %p148
        $region30: #{tpu_custom_call.1} parent=11 // pred_check_branch
          %234 = sbr.rel (%p232) target = $region32
        $region31: #{tpu_custom_call.1} parent=11 // pred_region
          _
        $region32: #{tpu_custom_call.1} parent=11 // pred_fallthru
          _
        // Predicated region
        $region33: #{tpu_custom_call.1} parent=11 // pred_check
          %p235 = pneg %p169
        $region34: #{tpu_custom_call.1} parent=11 // pred_check_branch
          %237 = sbr.rel (%p235) target = $region36
        $region35: #{tpu_custom_call.1} parent=11 // pred_region
          _
        $region36: #{tpu_custom_call.1} parent=11 // pred_fallthru
          _
      $region12: #{tpu_custom_call.1} parent=5 // pred_fallthru
        _
      %p238 = scmp.lt.s32.totalorder %s17, 2
      // Predicated region
      $region37: #{tpu_custom_call.1} parent=5 // pred_check
        %p239 = pneg %p238
      $region38: #{tpu_custom_call.1} parent=5 // pred_check_branch
        %241 = sbr.rel (%p239) target = $region40
      $region39: #{tpu_custom_call.1} parent=5 // pred_region
        // Predicated region
        $region41: #{tpu_custom_call.1} parent=39 // pred_check
          %p242 = pneg %p37
        $region42: #{tpu_custom_call.1} parent=39 // pred_check_branch
          %244 = sbr.rel (%p242) target = $region44
        $region43: #{tpu_custom_call.1} parent=39 // pred_region
          %p245 = scmp.lt.s32.totalorder %s17, 1
          %s246 = scalar_select %p245, %s17, 1
          %s247 = smul.addr %s246, 72
          %s248 = smul.addr %s247, 4
          %s249 = scalar_lea.vmem %s0, %s248
        $region44: #{tpu_custom_call.1} parent=39 // pred_fallthru
          _
      $region40: #{tpu_custom_call.1} parent=5 // pred_fallthru
        _
      %p250 = scmp.le.s32.totalorder 1, %s17
      %p251 = scmp.lt.s32.totalorder %s17, 3
      %p252 = pnand %p250, %p251
      %p253 = pneg %p252
      // Predicated region
      $region45: #{tpu_custom_call.1} parent=5 // pred_check
        _
      $region46: #{tpu_custom_call.1} parent=5 // pred_check_branch
        %255 = sbr.rel (%p252) target = $region48
      $region47: #{tpu_custom_call.1} parent=5 // pred_region
        %s256 = ssub.s32 %s17, 1
        // Predicated region
        $region49: #{tpu_custom_call.1} parent=47 // pred_check
          %p257 = pneg %p106
        $region50: #{tpu_custom_call.1} parent=47 // pred_check_branch
          %259 = sbr.rel (%p257) target = $region52
        $region51: #{tpu_custom_call.1} parent=47 // pred_region
          %260 = dma.done [#allocation3], 9216
        $region52: #{tpu_custom_call.1} parent=47 // pred_fallthru
          _
        %p261 = scmp.lt.s32.totalorder %s22, 1
        %s262 = scalar_select %p261, %s22, 1
        %s263 = smul.addr %s262, 72
        %s264 = smul.addr %s263, 4
        %s265 = scalar_lea.vmem %s0, %s264
        %p266 = pneg %p43
        %p267 = pneg %p40
        %p268 = pneg %p64
        %p269 = pneg %p61
        %p270 = pneg %p85
        %p271 = pneg %p82
        %p272 = pneg %p106
        %p273 = pneg %p103
        %p274 = pneg %p127
        %p275 = pneg %p124
        %p276 = pneg %p148
        %p277 = pneg %p145
        %p278 = pneg %p169
        %p279 = pneg %p166
        %p280 = pneg %p195
        %p281 = pneg %p192
        %s282 = sand.u32 %s182, 1
        %s283 = scalar_lea.sflag [#allocation4], %s282
        %s284 = sand.u32 %s182, 1
        %s285 = smul.addr %s284, 64
        %s286 = scalar_lea.vmem [#allocation5], %s285
        %p287 = scmp.lt.s32.totalorder %s22, 1
        %s288 = scalar_select %p287, %s22, 1
        %s289 = smul.addr %s288, 72
        %s290 = smul.addr %s289, 4
        %s291 = scalar_lea.vmem %s0, %s290
        %v293 = vld [vmem:[%s291] sm:$0xf]
        %v294 = vld [vmem:[%s291 + $0x8] sm:$0xf]
        %v295 = vld [vmem:[%s291 + $0x10] sm:$0xf]
        %v296 = vld [vmem:[%s291 + $0x18] sm:$0xf]
        %v297 = vld [vmem:[%s291 + $0x20] sm:$0xf]
        %v298 = vld [vmem:[%s291 + $0x28] sm:$0xf]
        %v299 = vld [vmem:[%s291 + $0x30] sm:$0xf]
        %v300 = vld [vmem:[%s291 + $0x38] sm:$0xf]
        %s301 = scalar_lea.vmem %s291, 72
        %v302 = vld [vmem:[%s301] sm:$0xf]
        %v303 = vld [vmem:[%s301 + $0x8] sm:$0xf]
        %v304 = vld [vmem:[%s301 + $0x10] sm:$0xf]
        %v305 = vld [vmem:[%s301 + $0x18] sm:$0xf]
        %v306 = vld [vmem:[%s301 + $0x20] sm:$0xf]
        %v307 = vld [vmem:[%s301 + $0x28] sm:$0xf]
        %v308 = vld [vmem:[%s301 + $0x30] sm:$0xf]
        %v309 = vld [vmem:[%s301 + $0x38] sm:$0xf]
        %v310 = vld [vmem:[%s291 + $0x4] sm:$0x1]
        %v311 = vld [vmem:[%s291 + $0xc] sm:$0x1]
        %v312 = vld [vmem:[%s291 + $0x14] sm:$0x1]
        %v313 = vld [vmem:[%s291 + $0x1c] sm:$0x1]
        %v314 = vld [vmem:[%s291 + $0x24] sm:$0x1]
        %v315 = vld [vmem:[%s291 + $0x2c] sm:$0x1]
        %v316 = vld [vmem:[%s291 + $0x34] sm:$0x1]
        %v317 = vld [vmem:[%s291 + $0x3c] sm:$0x1]
        %s318 = scalar_lea.vmem %s291, 144
        %v319 = vld [vmem:[%s318] sm:$0xf]
        %v320 = vld [vmem:[%s318 + $0x8] sm:$0xf]
        %v321 = vld [vmem:[%s318 + $0x10] sm:$0xf]
        %v322 = vld [vmem:[%s318 + $0x18] sm:$0xf]
        %v323 = vld [vmem:[%s318 + $0x20] sm:$0xf]
        %v324 = vld [vmem:[%s318 + $0x28] sm:$0xf]
        %v325 = vld [vmem:[%s318 + $0x30] sm:$0xf]
        %v326 = vld [vmem:[%s318 + $0x38] sm:$0xf]
        %s327 = scalar_lea.vmem %s291, 216
        %v328 = vld [vmem:[%s327] sm:$0xf]
        %v329 = vld [vmem:[%s327 + $0x8] sm:$0xf]
        %v330 = vld [vmem:[%s327 + $0x10] sm:$0xf]
        %v331 = vld [vmem:[%s327 + $0x18] sm:$0xf]
        %v332 = vld [vmem:[%s327 + $0x20] sm:$0xf]
        %v333 = vld [vmem:[%s327 + $0x28] sm:$0xf]
        %v334 = vld [vmem:[%s327 + $0x30] sm:$0xf]
        %v335 = vld [vmem:[%s327 + $0x38] sm:$0xf]
        %v336 = vld [vmem:[%s318 + $0x4] sm:$0x1]
        %v337 = vld [vmem:[%s318 + $0xc] sm:$0x1]
        %v338 = vld [vmem:[%s318 + $0x14] sm:$0x1]
        %v339 = vld [vmem:[%s318 + $0x1c] sm:$0x1]
        %v340 = vld [vmem:[%s318 + $0x24] sm:$0x1]
        %v341 = vld [vmem:[%s318 + $0x2c] sm:$0x1]
        %v342 = vld [vmem:[%s318 + $0x34] sm:$0x1]
        %v343 = vld [vmem:[%s318 + $0x3c] sm:$0x1]
        %s344 = scalar_lea.vmem %s291, 8
        %v345 = vld [vmem:[%s344] sm:$0xf]
        %v346 = vld [vmem:[%s344 + $0x8] sm:$0xf]
        %v347 = vld [vmem:[%s344 + $0x10] sm:$0xf]
        %v348 = vld [vmem:[%s344 + $0x18] sm:$0xf]
        %v349 = vld [vmem:[%s344 + $0x20] sm:$0xf]
        %v350 = vld [vmem:[%s344 + $0x28] sm:$0xf]
        %v351 = vld [vmem:[%s344 + $0x30] sm:$0xf]
        %v352 = vld [vmem:[%s344 + $0x38] sm:$0xf]
        %s353 = scalar_lea.vmem %s291, 80
        %v354 = vld [vmem:[%s353] sm:$0xf]
        %v355 = vld [vmem:[%s353 + $0x8] sm:$0xf]
        %v356 = vld [vmem:[%s353 + $0x10] sm:$0xf]
        %v357 = vld [vmem:[%s353 + $0x18] sm:$0xf]
        %v358 = vld [vmem:[%s353 + $0x20] sm:$0xf]
        %v359 = vld [vmem:[%s353 + $0x28] sm:$0xf]
        %v360 = vld [vmem:[%s353 + $0x30] sm:$0xf]
        %v361 = vld [vmem:[%s353 + $0x38] sm:$0xf]
        %v362 = vld [vmem:[%s344 + $0x4] sm:$0x1]
        %v363 = vld [vmem:[%s344 + $0xc] sm:$0x1]
        %v364 = vld [vmem:[%s344 + $0x14] sm:$0x1]
        %v365 = vld [vmem:[%s344 + $0x1c] sm:$0x1]
        %v366 = vld [vmem:[%s344 + $0x24] sm:$0x1]
        %v367 = vld [vmem:[%s344 + $0x2c] sm:$0x1]
        %v368 = vld [vmem:[%s344 + $0x34] sm:$0x1]
        %v369 = vld [vmem:[%s344 + $0x3c] sm:$0x1]
        %v386 = vunpack.c.l.b16 %v293
        %v387 = vunpack.c.l.b16 %v310
        %v388 = vunpack.c.l.b16 %v294
        %v389 = vunpack.c.l.b16 %v311
        %v390 = vunpack.c.l.b16 %v295
        %v391 = vunpack.c.l.b16 %v312
        %v392 = vunpack.c.l.b16 %v296
        %v393 = vunpack.c.l.b16 %v313
        %v394 = vunpack.c.l.b16 %v297
        %v395 = vunpack.c.l.b16 %v314
        %v396 = vunpack.c.l.b16 %v298
        %v397 = vunpack.c.l.b16 %v315
        %v398 = vunpack.c.l.b16 %v299
        %v399 = vunpack.c.l.b16 %v316
        %v400 = vunpack.c.l.b16 %v300
        %v401 = vunpack.c.l.b16 %v317
        %v402 = vpack.c.b16 %v387, %v386
        %v403 = vpack.c.b16 %v389, %v388
        %v404 = vpack.c.b16 %v391, %v390
        %v405 = vpack.c.b16 %v393, %v392
        %v406 = vpack.c.b16 %v395, %v394
        %v407 = vpack.c.b16 %v397, %v396
        %v408 = vpack.c.b16 %v399, %v398
        %v409 = vpack.c.b16 %v401, %v400
        %v411 = vshrl.u32 %v402, 16
        %v413 = vshll.u32 %v402, 16
        %v415 = vrot.slane %v413, 1
        %v416 = vor.u32 %v411, %v415
        %v418 = vshrl.u32 %v403, 16
        %v420 = vshll.u32 %v403, 16
        %v422 = vrot.slane %v420, 1
        %v423 = vor.u32 %v418, %v422
        %v425 = vshrl.u32 %v404, 16
        %v427 = vshll.u32 %v404, 16
        %v429 = vrot.slane %v427, 1
        %v430 = vor.u32 %v425, %v429
        %v432 = vshrl.u32 %v405, 16
        %v434 = vshll.u32 %v405, 16
        %v436 = vrot.slane %v434, 1
        %v437 = vor.u32 %v432, %v436
        %v439 = vshrl.u32 %v406, 16
        %v441 = vshll.u32 %v406, 16
        %v443 = vrot.slane %v441, 1
        %v444 = vor.u32 %v439, %v443
        %v446 = vshrl.u32 %v407, 16
        %v448 = vshll.u32 %v407, 16
        %v450 = vrot.slane %v448, 1
        %v451 = vor.u32 %v446, %v450
        %v453 = vshrl.u32 %v408, 16
        %v455 = vshll.u32 %v408, 16
        %v457 = vrot.slane %v455, 1
        %v458 = vor.u32 %v453, %v457
        %v460 = vshrl.u32 %v409, 16
        %v462 = vshll.u32 %v409, 16
        %v464 = vrot.slane %v462, 1
        %v465 = vor.u32 %v460, %v464
        %v482 = vunpack.c.l.b16 %v319
        %v483 = vunpack.c.l.b16 %v336
        %v484 = vunpack.c.l.b16 %v320
        %v485 = vunpack.c.l.b16 %v337
        %v486 = vunpack.c.l.b16 %v321
        %v487 = vunpack.c.l.b16 %v338
        %v488 = vunpack.c.l.b16 %v322
        %v489 = vunpack.c.l.b16 %v339
        %v490 = vunpack.c.l.b16 %v323
        %v491 = vunpack.c.l.b16 %v340
        %v492 = vunpack.c.l.b16 %v324
        %v493 = vunpack.c.l.b16 %v341
        %v494 = vunpack.c.l.b16 %v325
        %v495 = vunpack.c.l.b16 %v342
        %v496 = vunpack.c.l.b16 %v326
        %v497 = vunpack.c.l.b16 %v343
        %v498 = vpack.c.b16 %v483, %v482
        %v499 = vpack.c.b16 %v485, %v484
        %v500 = vpack.c.b16 %v487, %v486
        %v501 = vpack.c.b16 %v489, %v488
        %v502 = vpack.c.b16 %v491, %v490
        %v503 = vpack.c.b16 %v493, %v492
        %v504 = vpack.c.b16 %v495, %v494
        %v505 = vpack.c.b16 %v497, %v496
        %v507 = vshrl.u32 %v498, 16
        %v509 = vshll.u32 %v498, 16
        %v511 = vrot.slane %v509, 1
        %v512 = vor.u32 %v507, %v511
        %v514 = vshrl.u32 %v499, 16
        %v516 = vshll.u32 %v499, 16
        %v518 = vrot.slane %v516, 1
        %v519 = vor.u32 %v514, %v518
        %v521 = vshrl.u32 %v500, 16
        %v523 = vshll.u32 %v500, 16
        %v525 = vrot.slane %v523, 1
        %v526 = vor.u32 %v521, %v525
        %v528 = vshrl.u32 %v501, 16
        %v530 = vshll.u32 %v501, 16
        %v532 = vrot.slane %v530, 1
        %v533 = vor.u32 %v528, %v532
        %v535 = vshrl.u32 %v502, 16
        %v537 = vshll.u32 %v502, 16
        %v539 = vrot.slane %v537, 1
        %v540 = vor.u32 %v535, %v539
        %v542 = vshrl.u32 %v503, 16
        %v544 = vshll.u32 %v503, 16
        %v546 = vrot.slane %v544, 1
        %v547 = vor.u32 %v542, %v546
        %v549 = vshrl.u32 %v504, 16
        %v551 = vshll.u32 %v504, 16
        %v553 = vrot.slane %v551, 1
        %v554 = vor.u32 %v549, %v553
        %v556 = vshrl.u32 %v505, 16
        %v558 = vshll.u32 %v505, 16
        %v560 = vrot.slane %v558, 1
        %v561 = vor.u32 %v556, %v560
        %v578 = vunpack.c.l.b16 %v345
        %v579 = vunpack.c.l.b16 %v362
        %v580 = vunpack.c.l.b16 %v346
        %v581 = vunpack.c.l.b16 %v363
        %v582 = vunpack.c.l.b16 %v347
        %v583 = vunpack.c.l.b16 %v364
        %v584 = vunpack.c.l.b16 %v348
        %v585 = vunpack.c.l.b16 %v365
        %v586 = vunpack.c.l.b16 %v349
        %v587 = vunpack.c.l.b16 %v366
        %v588 = vunpack.c.l.b16 %v350
        %v589 = vunpack.c.l.b16 %v367
        %v590 = vunpack.c.l.b16 %v351
        %v591 = vunpack.c.l.b16 %v368
        %v592 = vunpack.c.l.b16 %v352
        %v593 = vunpack.c.l.b16 %v369
        %v594 = vpack.c.b16 %v579, %v578
        %v595 = vpack.c.b16 %v581, %v580
        %v596 = vpack.c.b16 %v583, %v582
        %v597 = vpack.c.b16 %v585, %v584
        %v598 = vpack.c.b16 %v587, %v586
        %v599 = vpack.c.b16 %v589, %v588
        %v600 = vpack.c.b16 %v591, %v590
        %v601 = vpack.c.b16 %v593, %v592
        %v603 = vshrl.u32 %v594, 16
        %v605 = vshll.u32 %v594, 16
        %v607 = vrot.slane %v605, 1
        %v608 = vor.u32 %v603, %v607
        %v610 = vshrl.u32 %v595, 16
        %v612 = vshll.u32 %v595, 16
        %v614 = vrot.slane %v612, 1
        %v615 = vor.u32 %v610, %v614
        %v617 = vshrl.u32 %v596, 16
        %v619 = vshll.u32 %v596, 16
        %v621 = vrot.slane %v619, 1
        %v622 = vor.u32 %v617, %v621
        %v624 = vshrl.u32 %v597, 16
        %v626 = vshll.u32 %v597, 16
        %v628 = vrot.slane %v626, 1
        %v629 = vor.u32 %v624, %v628
        %v631 = vshrl.u32 %v598, 16
        %v633 = vshll.u32 %v598, 16
        %v635 = vrot.slane %v633, 1
        %v636 = vor.u32 %v631, %v635
        %v638 = vshrl.u32 %v599, 16
        %v640 = vshll.u32 %v599, 16
        %v642 = vrot.slane %v640, 1
        %v643 = vor.u32 %v638, %v642
        %v645 = vshrl.u32 %v600, 16
        %v647 = vshll.u32 %v600, 16
        %v649 = vrot.slane %v647, 1
        %v650 = vor.u32 %v645, %v649
        %v652 = vshrl.u32 %v601, 16
        %v654 = vshll.u32 %v601, 16
        %v656 = vrot.slane %v654, 1
        %v657 = vor.u32 %v652, %v656
        %v682 = vunpack.c.l.b16 %v302
        %v683 = vunpack.c.l.b16 %v416
        %v684 = vunpack.c.l.b16 %v328
        %v685 = vunpack.c.l.b16 %v512
        %v686 = vunpack.c.l.b16 %v354
        %v687 = vunpack.c.l.b16 %v608
        %v688 = vunpack.c.l.b16 %v303
        %v689 = vunpack.c.l.b16 %v423
        %v690 = vunpack.c.l.b16 %v329
        %v691 = vunpack.c.l.b16 %v519
        %v692 = vunpack.c.l.b16 %v355
        %v693 = vunpack.c.l.b16 %v615
        %v694 = vunpack.c.l.b16 %v304
        %v695 = vunpack.c.l.b16 %v430
        %v696 = vunpack.c.l.b16 %v330
        %v697 = vunpack.c.l.b16 %v526
        %v698 = vunpack.c.l.b16 %v356
        %v699 = vunpack.c.l.b16 %v622
        %v700 = vunpack.c.l.b16 %v305
        %v701 = vunpack.c.l.b16 %v437
        %v702 = vunpack.c.l.b16 %v331
        %v703 = vunpack.c.l.b16 %v533
        %v704 = vunpack.c.l.b16 %v357
        %v705 = vunpack.c.l.b16 %v629
        %v706 = vunpack.c.l.b16 %v306
        %v707 = vunpack.c.l.b16 %v444
        %v708 = vunpack.c.l.b16 %v332
        %v709 = vunpack.c.l.b16 %v540
        %v710 = vunpack.c.l.b16 %v358
        %v711 = vunpack.c.l.b16 %v636
        %v712 = vunpack.c.l.b16 %v307
        %v713 = vunpack.c.l.b16 %v451
        %v714 = vunpack.c.l.b16 %v333
        %v715 = vunpack.c.l.b16 %v547
        %v716 = vunpack.c.l.b16 %v359
        %v717 = vunpack.c.l.b16 %v643
        %v718 = vunpack.c.l.b16 %v308
        %v719 = vunpack.c.l.b16 %v458
        %v720 = vunpack.c.l.b16 %v334
        %v721 = vunpack.c.l.b16 %v554
        %v722 = vunpack.c.l.b16 %v360
        %v723 = vunpack.c.l.b16 %v650
        %v724 = vunpack.c.l.b16 %v309
        %v725 = vunpack.c.l.b16 %v465
        %v726 = vunpack.c.l.b16 %v335
        %v727 = vunpack.c.l.b16 %v561
        %v728 = vunpack.c.l.b16 %v361
        %v729 = vunpack.c.l.b16 %v657
        %v730 = vld [vmem:[%s1] sm:$0xf]
        %v731 = vld [vmem:[%s1 + $0x4] sm:$0xf]
        %v732 = vld [vmem:[%s1 + $0x8] sm:$0xf]
        %v733 = vld [vmem:[%s1 + $0xc] sm:$0xf]
        %v734 = vld [vmem:[%s1 + $0x10] sm:$0xf]
        %v735 = vld [vmem:[%s1 + $0x14] sm:$0xf]
        %v736 = vld [vmem:[%s1 + $0x18] sm:$0xf]
        %v737 = vld [vmem:[%s1 + $0x1c] sm:$0xf]
        %v738 = vld [vmem:[%s1 + $0x20] sm:$0xf]
        %v739 = vld [vmem:[%s1 + $0x24] sm:$0xf]
        %v740 = vld [vmem:[%s1 + $0x28] sm:$0xf]
        %v741 = vld [vmem:[%s1 + $0x2c] sm:$0xf]
        %v742 = vld [vmem:[%s1 + $0x30] sm:$0xf]
        %v743 = vld [vmem:[%s1 + $0x34] sm:$0xf]
        %v744 = vld [vmem:[%s1 + $0x38] sm:$0xf]
        %v745 = vld [vmem:[%s1 + $0x3c] sm:$0xf]
        %v746 = vld [vmem:[%s1 + $0x40] sm:$0xf]
        %v747 = vld [vmem:[%s1 + $0x44] sm:$0xf]
        %v748 = vld [vmem:[%s1 + $0x48] sm:$0xf]
        %v749 = vld [vmem:[%s1 + $0x4c] sm:$0xf]
        %v750 = vld [vmem:[%s1 + $0x50] sm:$0xf]
        %v751 = vld [vmem:[%s1 + $0x54] sm:$0xf]
        %v752 = vld [vmem:[%s1 + $0x58] sm:$0xf]
        %v753 = vld [vmem:[%s1 + $0x5c] sm:$0xf]
        %v754 = vld [vmem:[%s1 + $0x60] sm:$0xf]
        %v755 = vld [vmem:[%s1 + $0x64] sm:$0xf]
        %v756 = vld [vmem:[%s1 + $0x68] sm:$0xf]
        %v757 = vld [vmem:[%s1 + $0x6c] sm:$0xf]
        %v758 = vld [vmem:[%s1 + $0x70] sm:$0xf]
        %v759 = vld [vmem:[%s1 + $0x74] sm:$0xf]
        %v760 = vld [vmem:[%s1 + $0x78] sm:$0xf]
        %v761 = vld [vmem:[%s1 + $0x7c] sm:$0xf]
        %v762 = vld [vmem:[%s1 + $0x80] sm:$0xf]
        %v763 = vld [vmem:[%s1 + $0x84] sm:$0xf]
        %v764 = vld [vmem:[%s1 + $0x88] sm:$0xf]
        %v765 = vld [vmem:[%s1 + $0x8c] sm:$0xf]
        %v766 = vld [vmem:[%s1 + $0x90] sm:$0xf]
        %v767 = vld [vmem:[%s1 + $0x94] sm:$0xf]
        %v768 = vld [vmem:[%s1 + $0x98] sm:$0xf]
        %v769 = vld [vmem:[%s1 + $0x9c] sm:$0xf]
        %v770 = vld [vmem:[%s1 + $0xa0] sm:$0xf]
        %v771 = vld [vmem:[%s1 + $0xa4] sm:$0xf]
        %v772 = vld [vmem:[%s1 + $0xa8] sm:$0xf]
        %v773 = vld [vmem:[%s1 + $0xac] sm:$0xf]
        %v774 = vld [vmem:[%s1 + $0xb0] sm:$0xf]
        %v775 = vld [vmem:[%s1 + $0xb4] sm:$0xf]
        %v776 = vld [vmem:[%s1 + $0xb8] sm:$0xf]
        %v777 = vld [vmem:[%s1 + $0xbc] sm:$0xf]
        %v778 = vld [vmem:[%s1 + $0xc0] sm:$0xf]
        %v779 = vld [vmem:[%s1 + $0xc4] sm:$0xf]
        %v780 = vld [vmem:[%s1 + $0xc8] sm:$0xf]
        %v781 = vld [vmem:[%s1 + $0xcc] sm:$0xf]
        %v782 = vld [vmem:[%s1 + $0xd0] sm:$0xf]
        %v783 = vld [vmem:[%s1 + $0xd4] sm:$0xf]
        %v784 = vld [vmem:[%s1 + $0xd8] sm:$0xf]
        %v785 = vld [vmem:[%s1 + $0xdc] sm:$0xf]
        %v786 = vld [vmem:[%s1 + $0xe0] sm:$0xf]
        %v787 = vld [vmem:[%s1 + $0xe4] sm:$0xf]
        %v788 = vld [vmem:[%s1 + $0xe8] sm:$0xf]
        %v789 = vld [vmem:[%s1 + $0xec] sm:$0xf]
        %v790 = vld [vmem:[%s1 + $0xf0] sm:$0xf]
        %v791 = vld [vmem:[%s1 + $0xf4] sm:$0xf]
        %v792 = vld [vmem:[%s1 + $0xf8] sm:$0xf]
        %v793 = vld [vmem:[%s1 + $0xfc] sm:$0xf]
        %v794 = vld [vmem:[%s1 + $0x100] sm:$0xf]
        %v795 = vld [vmem:[%s1 + $0x104] sm:$0xf]
        %v796 = vld [vmem:[%s1 + $0x108] sm:$0xf]
        %v797 = vld [vmem:[%s1 + $0x10c] sm:$0xf]
        %v798 = vld [vmem:[%s1 + $0x110] sm:$0xf]
        %v799 = vld [vmem:[%s1 + $0x114] sm:$0xf]
        %v800 = vld [vmem:[%s1 + $0x118] sm:$0xf]
        %v801 = vld [vmem:[%s1 + $0x11c] sm:$0xf]
        %v802 = vld [vmem:[%s1 + $0x120] sm:$0xf]
        %v803 = vld [vmem:[%s1 + $0x124] sm:$0xf]
        %v804 = vld [vmem:[%s1 + $0x128] sm:$0xf]
        %v805 = vld [vmem:[%s1 + $0x12c] sm:$0xf]
        %v806 = vld [vmem:[%s1 + $0x130] sm:$0xf]
        %v807 = vld [vmem:[%s1 + $0x134] sm:$0xf]
        %v808 = vld [vmem:[%s1 + $0x138] sm:$0xf]
        %v809 = vld [vmem:[%s1 + $0x13c] sm:$0xf]
        %v810 = vld [vmem:[%s1 + $0x140] sm:$0xf]
        %v811 = vld [vmem:[%s1 + $0x144] sm:$0xf]
        %v812 = vld [vmem:[%s1 + $0x148] sm:$0xf]
        %v813 = vld [vmem:[%s1 + $0x14c] sm:$0xf]
        %v814 = vld [vmem:[%s1 + $0x150] sm:$0xf]
        %v815 = vld [vmem:[%s1 + $0x154] sm:$0xf]
        %v816 = vld [vmem:[%s1 + $0x158] sm:$0xf]
        %v817 = vld [vmem:[%s1 + $0x15c] sm:$0xf]
        %v818 = vld [vmem:[%s1 + $0x160] sm:$0xf]
        %v819 = vld [vmem:[%s1 + $0x164] sm:$0xf]
        %v820 = vld [vmem:[%s1 + $0x168] sm:$0xf]
        %v821 = vld [vmem:[%s1 + $0x16c] sm:$0xf]
        %v822 = vld [vmem:[%s1 + $0x170] sm:$0xf]
        %v823 = vld [vmem:[%s1 + $0x174] sm:$0xf]
        %v824 = vld [vmem:[%s1 + $0x178] sm:$0xf]
        %v825 = vld [vmem:[%s1 + $0x17c] sm:$0xf]
        %v826 = vld [vmem:[%s1 + $0x180] sm:$0xf]
        %v827 = vld [vmem:[%s1 + $0x184] sm:$0xf]
        %v828 = vld [vmem:[%s1 + $0x188] sm:$0xf]
        %v829 = vld [vmem:[%s1 + $0x18c] sm:$0xf]
        %v830 = vld [vmem:[%s1 + $0x190] sm:$0xf]
        %v831 = vld [vmem:[%s1 + $0x194] sm:$0xf]
        %v832 = vld [vmem:[%s1 + $0x198] sm:$0xf]
        %v833 = vld [vmem:[%s1 + $0x19c] sm:$0xf]
        %v834 = vld [vmem:[%s1 + $0x1a0] sm:$0xf]
        %v835 = vld [vmem:[%s1 + $0x1a4] sm:$0xf]
        %v836 = vld [vmem:[%s1 + $0x1a8] sm:$0xf]
        %v837 = vld [vmem:[%s1 + $0x1ac] sm:$0xf]
        %v838 = vld [vmem:[%s1 + $0x1b0] sm:$0xf]
        %v839 = vld [vmem:[%s1 + $0x1b4] sm:$0xf]
        %v840 = vld [vmem:[%s1 + $0x1b8] sm:$0xf]
        %v841 = vld [vmem:[%s1 + $0x1bc] sm:$0xf]
        %v842 = vld [vmem:[%s1 + $0x1c0] sm:$0xf]
        %v843 = vld [vmem:[%s1 + $0x1c4] sm:$0xf]
        %v844 = vld [vmem:[%s1 + $0x1c8] sm:$0xf]
        %v845 = vld [vmem:[%s1 + $0x1cc] sm:$0xf]
        %v846 = vld [vmem:[%s1 + $0x1d0] sm:$0xf]
        %v847 = vld [vmem:[%s1 + $0x1d4] sm:$0xf]
        %v848 = vld [vmem:[%s1 + $0x1d8] sm:$0xf]
        %v849 = vld [vmem:[%s1 + $0x1dc] sm:$0xf]
        %v850 = vld [vmem:[%s1 + $0x1e0] sm:$0xf]
        %v851 = vld [vmem:[%s1 + $0x1e4] sm:$0xf]
        %v852 = vld [vmem:[%s1 + $0x1e8] sm:$0xf]
        %v853 = vld [vmem:[%s1 + $0x1ec] sm:$0xf]
        %v854 = vld [vmem:[%s1 + $0x1f0] sm:$0xf]
        %v855 = vld [vmem:[%s1 + $0x1f4] sm:$0xf]
        %v856 = vld [vmem:[%s1 + $0x1f8] sm:$0xf]
        %v857 = vld [vmem:[%s1 + $0x1fc] sm:$0xf]
        %v858 = vld [vmem:[%s1 + $0x200] sm:$0xf]
        %v859 = vld [vmem:[%s1 + $0x204] sm:$0xf]
        %v860 = vld [vmem:[%s1 + $0x208] sm:$0xf]
        %v861 = vld [vmem:[%s1 + $0x20c] sm:$0xf]
        %v862 = vld [vmem:[%s1 + $0x210] sm:$0xf]
        %v863 = vld [vmem:[%s1 + $0x214] sm:$0xf]
        %v864 = vld [vmem:[%s1 + $0x218] sm:$0xf]
        %v865 = vld [vmem:[%s1 + $0x21c] sm:$0xf]
        %v866 = vld [vmem:[%s1 + $0x220] sm:$0xf]
        %v867 = vld [vmem:[%s1 + $0x224] sm:$0xf]
        %v868 = vld [vmem:[%s1 + $0x228] sm:$0xf]
        %v869 = vld [vmem:[%s1 + $0x22c] sm:$0xf]
        %v870 = vld [vmem:[%s1 + $0x230] sm:$0xf]
        %v871 = vld [vmem:[%s1 + $0x234] sm:$0xf]
        %v872 = vld [vmem:[%s1 + $0x238] sm:$0xf]
        %v873 = vld [vmem:[%s1 + $0x23c] sm:$0xf]
        %v874 = vld [vmem:[%s2] sm:$0x1]
        %v876 = vlaneseq
        %v877 = vshrl.u32 %v876, 7
        %v878 = vsub.s32 0, %v877
        %v879 = vrot.slane %v874, %v878
        %v881 = vpack.c.b16 %v388, %v386
        %v882 = vpack.c.b16 %v688, %v682
        %v883 = vpack.c.b16 %v689, %v683
        %v884 = vpack.c.b16 %v484, %v482
        %v885 = vpack.c.b16 %v690, %v684
        %v886 = vpack.c.b16 %v691, %v685
        %v887 = vpack.c.b16 %v580, %v578
        %v888 = vpack.c.b16 %v692, %v686
        %v889 = vpack.c.b16 %v693, %v687
        %v890 = vpack.c.b16 %v392, %v390
        %v891 = vpack.c.b16 %v700, %v694
        %v892 = vpack.c.b16 %v701, %v695
        %v893 = vpack.c.b16 %v488, %v486
        %v894 = vpack.c.b16 %v702, %v696
        %v895 = vpack.c.b16 %v703, %v697
        %v896 = vpack.c.b16 %v584, %v582
        %v897 = vpack.c.b16 %v704, %v698
        %v898 = vpack.c.b16 %v705, %v699
        %v899 = vpack.c.b16 %v396, %v394
        %v900 = vpack.c.b16 %v712, %v706
        %v901 = vpack.c.b16 %v713, %v707
        %v902 = vpack.c.b16 %v492, %v490
        %v903 = vpack.c.b16 %v714, %v708
        %v904 = vpack.c.b16 %v715, %v709
        %v905 = vpack.c.b16 %v588, %v586
        %v906 = vpack.c.b16 %v716, %v710
        %v907 = vpack.c.b16 %v717, %v711
        %v908 = vpack.c.b16 %v400, %v398
        %v909 = vpack.c.b16 %v724, %v718
        %v910 = vpack.c.b16 %v725, %v719
        %v911 = vpack.c.b16 %v496, %v494
        %v912 = vpack.c.b16 %v726, %v720
        %v913 = vpack.c.b16 %v727, %v721
        %v914 = vpack.c.b16 %v592, %v590
        %v915 = vpack.c.b16 %v728, %v722
        %v916 = vpack.c.b16 %v729, %v723
        %v1097 = vunpack.c.l.b16 %v730
        %v1098 = vunpack.c.l.b16 %v731
        %v1099 = vunpack.c.l.b16 %v732
        %v1100 = vunpack.c.l.b16 %v733
        %v1101 = vunpack.c.l.b16 %v734
        %v1102 = vunpack.c.l.b16 %v735
        %v1103 = vunpack.c.l.b16 %v736
        %v1104 = vunpack.c.l.b16 %v737
        %v1105 = vunpack.c.l.b16 %v738
        %v1106 = vunpack.c.l.b16 %v739
        %v1107 = vunpack.c.l.b16 %v740
        %v1108 = vunpack.c.l.b16 %v741
        %v1109 = vunpack.c.l.b16 %v742
        %v1110 = vunpack.c.l.b16 %v743
        %v1111 = vunpack.c.l.b16 %v744
        %v1112 = vunpack.c.l.b16 %v745
        %v1113 = vunpack.c.l.b16 %v746
        %v1114 = vunpack.c.l.b16 %v747
        %v1115 = vunpack.c.l.b16 %v748
        %v1116 = vunpack.c.l.b16 %v749
        %v1117 = vunpack.c.l.b16 %v750
        %v1118 = vunpack.c.l.b16 %v751
        %v1119 = vunpack.c.l.b16 %v752
        %v1120 = vunpack.c.l.b16 %v753
        %v1121 = vunpack.c.l.b16 %v754
        %v1122 = vunpack.c.l.b16 %v755
        %v1123 = vunpack.c.l.b16 %v756
        %v1124 = vunpack.c.l.b16 %v757
        %v1125 = vunpack.c.l.b16 %v758
        %v1126 = vunpack.c.l.b16 %v759
        %v1127 = vunpack.c.l.b16 %v760
        %v1128 = vunpack.c.l.b16 %v761
        %v1129 = vunpack.c.l.b16 %v762
        %v1130 = vunpack.c.l.b16 %v763
        %v1131 = vunpack.c.l.b16 %v764
        %v1132 = vunpack.c.l.b16 %v765
        %v1133 = vunpack.c.l.b16 %v766
        %v1134 = vunpack.c.l.b16 %v767
        %v1135 = vunpack.c.l.b16 %v768
        %v1136 = vunpack.c.l.b16 %v769
        %v1137 = vunpack.c.l.b16 %v770
        %v1138 = vunpack.c.l.b16 %v771
        %v1139 = vunpack.c.l.b16 %v772
        %v1140 = vunpack.c.l.b16 %v773
        %v1141 = vunpack.c.l.b16 %v774
        %v1142 = vunpack.c.l.b16 %v775
        %v1143 = vunpack.c.l.b16 %v776
        %v1144 = vunpack.c.l.b16 %v777
        %v1145 = vunpack.c.l.b16 %v778
        %v1146 = vunpack.c.l.b16 %v779
        %v1147 = vunpack.c.l.b16 %v780
        %v1148 = vunpack.c.l.b16 %v781
        %v1149 = vunpack.c.l.b16 %v782
        %v1150 = vunpack.c.l.b16 %v783
        %v1151 = vunpack.c.l.b16 %v784
        %v1152 = vunpack.c.l.b16 %v785
        %v1153 = vunpack.c.l.b16 %v786
        %v1154 = vunpack.c.l.b16 %v787
        %v1155 = vunpack.c.l.b16 %v788
        %v1156 = vunpack.c.l.b16 %v789
        %v1157 = vunpack.c.l.b16 %v790
        %v1158 = vunpack.c.l.b16 %v791
        %v1159 = vunpack.c.l.b16 %v792
        %v1160 = vunpack.c.l.b16 %v793
        %v1161 = vunpack.c.l.b16 %v794
        %v1162 = vunpack.c.l.b16 %v795
        %v1163 = vunpack.c.l.b16 %v796
        %v1164 = vunpack.c.l.b16 %v797
        %v1165 = vunpack.c.l.b16 %v798
        %v1166 = vunpack.c.l.b16 %v799
        %v1167 = vunpack.c.l.b16 %v800
        %v1168 = vunpack.c.l.b16 %v801
        %v1169 = vunpack.c.l.b16 %v802
        %v1170 = vunpack.c.l.b16 %v803
        %v1171 = vunpack.c.l.b16 %v804
        %v1172 = vunpack.c.l.b16 %v805
        %v1173 = vunpack.c.l.b16 %v806
        %v1174 = vunpack.c.l.b16 %v807
        %v1175 = vunpack.c.l.b16 %v808
        %v1176 = vunpack.c.l.b16 %v809
        %v1177 = vunpack.c.l.b16 %v810
        %v1178 = vunpack.c.l.b16 %v811
        %v1179 = vunpack.c.l.b16 %v812
        %v1180 = vunpack.c.l.b16 %v813
        %v1181 = vunpack.c.l.b16 %v814
        %v1182 = vunpack.c.l.b16 %v815
        %v1183 = vunpack.c.l.b16 %v816
        %v1184 = vunpack.c.l.b16 %v817
        %v1185 = vunpack.c.l.b16 %v818
        %v1186 = vunpack.c.l.b16 %v819
        %v1187 = vunpack.c.l.b16 %v820
        %v1188 = vunpack.c.l.b16 %v821
        %v1189 = vunpack.c.l.b16 %v822
        %v1190 = vunpack.c.l.b16 %v823
        %v1191 = vunpack.c.l.b16 %v824
        %v1192 = vunpack.c.l.b16 %v825
        %v1193 = vunpack.c.l.b16 %v826
        %v1194 = vunpack.c.l.b16 %v827
        %v1195 = vunpack.c.l.b16 %v828
        %v1196 = vunpack.c.l.b16 %v829
        %v1197 = vunpack.c.l.b16 %v830
        %v1198 = vunpack.c.l.b16 %v831
        %v1199 = vunpack.c.l.b16 %v832
        %v1200 = vunpack.c.l.b16 %v833
        %v1201 = vunpack.c.l.b16 %v834
        %v1202 = vunpack.c.l.b16 %v835
        %v1203 = vunpack.c.l.b16 %v836
        %v1204 = vunpack.c.l.b16 %v837
        %v1205 = vunpack.c.l.b16 %v838
        %v1206 = vunpack.c.l.b16 %v839
        %v1207 = vunpack.c.l.b16 %v840
        %v1208 = vunpack.c.l.b16 %v841
        %v1209 = vunpack.c.l.b16 %v842
        %v1210 = vunpack.c.l.b16 %v843
        %v1211 = vunpack.c.l.b16 %v844
        %v1212 = vunpack.c.l.b16 %v845
        %v1213 = vunpack.c.l.b16 %v846
        %v1214 = vunpack.c.l.b16 %v847
        %v1215 = vunpack.c.l.b16 %v848
        %v1216 = vunpack.c.l.b16 %v849
        %v1217 = vunpack.c.l.b16 %v850
        %v1218 = vunpack.c.l.b16 %v851
        %v1219 = vunpack.c.l.b16 %v852
        %v1220 = vunpack.c.l.b16 %v853
        %v1221 = vunpack.c.l.b16 %v854
        %v1222 = vunpack.c.l.b16 %v855
        %v1223 = vunpack.c.l.b16 %v856
        %v1224 = vunpack.c.l.b16 %v857
        %v1225 = vunpack.c.l.b16 %v858
        %v1226 = vunpack.c.l.b16 %v859
        %v1227 = vunpack.c.l.b16 %v860
        %v1228 = vunpack.c.l.b16 %v861
        %v1229 = vunpack.c.l.b16 %v862
        %v1230 = vunpack.c.l.b16 %v863
        %v1231 = vunpack.c.l.b16 %v864
        %v1232 = vunpack.c.l.b16 %v865
        %v1233 = vunpack.c.l.b16 %v866
        %v1234 = vunpack.c.l.b16 %v867
        %v1235 = vunpack.c.l.b16 %v868
        %v1236 = vunpack.c.l.b16 %v869
        %v1237 = vunpack.c.l.b16 %v870
        %v1238 = vunpack.c.l.b16 %v871
        %v1239 = vunpack.c.l.b16 %v872
        %v1240 = vunpack.c.l.b16 %v873
        %v1241 = vpack.c.b16 %v1098, %v1097
        %v1242 = vpack.c.b16 %v1100, %v1099
        %v1243 = vpack.c.b16 %v1102, %v1101
        %v1244 = vpack.c.b16 %v1104, %v1103
        %v1245 = vpack.c.b16 %v1106, %v1105
        %v1246 = vpack.c.b16 %v1108, %v1107
        %v1247 = vpack.c.b16 %v1110, %v1109
        %v1248 = vpack.c.b16 %v1112, %v1111
        %v1249 = vpack.c.b16 %v1114, %v1113
        %v1250 = vpack.c.b16 %v1116, %v1115
        %v1251 = vpack.c.b16 %v1118, %v1117
        %v1252 = vpack.c.b16 %v1120, %v1119
        %v1253 = vpack.c.b16 %v1122, %v1121
        %v1254 = vpack.c.b16 %v1124, %v1123
        %v1255 = vpack.c.b16 %v1126, %v1125
        %v1256 = vpack.c.b16 %v1128, %v1127
        %v1257 = vpack.c.b16 %v1130, %v1129
        %v1258 = vpack.c.b16 %v1132, %v1131
        %v1259 = vpack.c.b16 %v1134, %v1133
        %v1260 = vpack.c.b16 %v1136, %v1135
        %v1261 = vpack.c.b16 %v1138, %v1137
        %v1262 = vpack.c.b16 %v1140, %v1139
        %v1263 = vpack.c.b16 %v1142, %v1141
        %v1264 = vpack.c.b16 %v1144, %v1143
        %v1265 = vpack.c.b16 %v1146, %v1145
        %v1266 = vpack.c.b16 %v1148, %v1147
        %v1267 = vpack.c.b16 %v1150, %v1149
        %v1268 = vpack.c.b16 %v1152, %v1151
        %v1269 = vpack.c.b16 %v1154, %v1153
        %v1270 = vpack.c.b16 %v1156, %v1155
        %v1271 = vpack.c.b16 %v1158, %v1157
        %v1272 = vpack.c.b16 %v1160, %v1159
        %v1273 = vpack.c.b16 %v1162, %v1161
        %v1274 = vpack.c.b16 %v1164, %v1163
        %v1275 = vpack.c.b16 %v1166, %v1165
        %v1276 = vpack.c.b16 %v1168, %v1167
        %v1277 = vpack.c.b16 %v1170, %v1169
        %v1278 = vpack.c.b16 %v1172, %v1171
        %v1279 = vpack.c.b16 %v1174, %v1173
        %v1280 = vpack.c.b16 %v1176, %v1175
        %v1281 = vpack.c.b16 %v1178, %v1177
        %v1282 = vpack.c.b16 %v1180, %v1179
        %v1283 = vpack.c.b16 %v1182, %v1181
        %v1284 = vpack.c.b16 %v1184, %v1183
        %v1285 = vpack.c.b16 %v1186, %v1185
        %v1286 = vpack.c.b16 %v1188, %v1187
        %v1287 = vpack.c.b16 %v1190, %v1189
        %v1288 = vpack.c.b16 %v1192, %v1191
        %v1289 = vpack.c.b16 %v1194, %v1193
        %v1290 = vpack.c.b16 %v1196, %v1195
        %v1291 = vpack.c.b16 %v1198, %v1197
        %v1292 = vpack.c.b16 %v1200, %v1199
        %v1293 = vpack.c.b16 %v1202, %v1201
        %v1294 = vpack.c.b16 %v1204, %v1203
        %v1295 = vpack.c.b16 %v1206, %v1205
        %v1296 = vpack.c.b16 %v1208, %v1207
        %v1297 = vpack.c.b16 %v1210, %v1209
        %v1298 = vpack.c.b16 %v1212, %v1211
        %v1299 = vpack.c.b16 %v1214, %v1213
        %v1300 = vpack.c.b16 %v1216, %v1215
        %v1301 = vpack.c.b16 %v1218, %v1217
        %v1302 = vpack.c.b16 %v1220, %v1219
        %v1303 = vpack.c.b16 %v1222, %v1221
        %v1304 = vpack.c.b16 %v1224, %v1223
        %v1305 = vpack.c.b16 %v1226, %v1225
        %v1306 = vpack.c.b16 %v1228, %v1227
        %v1307 = vpack.c.b16 %v1230, %v1229
        %v1308 = vpack.c.b16 %v1232, %v1231
        %v1309 = vpack.c.b16 %v1234, %v1233
        %v1310 = vpack.c.b16 %v1236, %v1235
        %v1311 = vpack.c.b16 %v1238, %v1237
        %v1312 = vpack.c.b16 %v1240, %v1239
        %1385 = vmatprep.subr.bf16.mxu0 0
        %1386 = vmatpush1.bf16.msra.mxu0 %v1241
        %1387 = vmatprep.subr.bf16.mxu0 0
        %1388 = vmatpush1.bf16.msra.mxu0 %v1242
        %1389 = vmatprep.subr.bf16.mxu0 0
        %1390 = vmatpush1.bf16.msra.mxu0 %v1243
        %1391 = vmatprep.subr.bf16.mxu0 0
        %1392 = vmatpush1.bf16.msra.mxu0 %v1244
        %1393 = vmatprep.subr.bf16.mxu0 0
        %1394 = vmatpush1.bf16.msra.mxu0 %v1245
        %1395 = vmatprep.subr.bf16.mxu0 0
        %1396 = vmatpush1.bf16.msra.mxu0 %v1246
        %1397 = vmatprep.subr.bf16.mxu0 0
        %1398 = vmatpush1.bf16.msra.mxu0 %v1247
        %1399 = vmatprep.subr.bf16.mxu0 0
        %1400 = vmatpush1.bf16.msra.mxu0 %v1248
        %1401 = vmatprep.subr.bf16.mxu0 0
        %1402 = vmatpush1.bf16.msra.mxu0 %v1249
        %1403 = vmatprep.subr.bf16.mxu0 0
        %1404 = vmatpush1.bf16.msra.mxu0 %v1250
        %1405 = vmatprep.subr.bf16.mxu0 0
        %1406 = vmatpush1.bf16.msra.mxu0 %v1251
        %1407 = vmatprep.subr.bf16.mxu0 0
        %1408 = vmatpush1.bf16.msra.mxu0 %v1252
        %1409 = vmatprep.subr.bf16.mxu0 0
        %1410 = vmatpush1.bf16.msra.mxu0 %v1253
        %1411 = vmatprep.subr.bf16.mxu0 0
        %1412 = vmatpush1.bf16.msra.mxu0 %v1254
        %1413 = vmatprep.subr.bf16.mxu0 0
        %1414 = vmatpush1.bf16.msra.mxu0 %v1255
        %1415 = vmatprep.subr.bf16.mxu0 0
        %1416 = vmatpush1.bf16.msra.mxu0 %v1256
        %1417 = vmatprep.mubr.bf16.mxu0 %v882
        %1418 = vmatmul.mubr.bf16.gmra.mrb[0].mxu0 %v881
        %v1419 = vpop.f32.mrb[0].mxu0
        %v1420 = vadd.f32 %v879, %v1419
        %v1421 = vpop.f32.mrb[0].mxu0
        %v1422 = vpop.f32.mrb[0].mxu0
        %v1423 = vadd.f32 %v879, %v1422
        %v1424 = vpop.f32.mrb[0].mxu0
        %1425 = vmatprep.mubr.bf16.mxu0 %v891
        %1426 = vmatmul.mubr.bf16.gmra.mrb[0].mxu0 %v890
        %v1427 = vpop.f32.mrb[0].mxu0
        %v1428 = vadd.f32 %v879, %v1427
        %v1429 = vpop.f32.mrb[0].mxu0
        %v1430 = vpop.f32.mrb[0].mxu0
        %v1431 = vadd.f32 %v879, %v1430
        %v1432 = vpop.f32.mrb[0].mxu0
        %1433 = vmatprep.mubr.bf16.mxu0 %v900
        %1434 = vmatmul.mubr.bf16.gmra.mrb[0].mxu0 %v899
        %v1435 = vpop.f32.mrb[0].mxu0
        %v1436 = vadd.f32 %v879, %v1435
        %v1437 = vpop.f32.mrb[0].mxu0
        %v1438 = vpop.f32.mrb[0].mxu0
        %v1439 = vadd.f32 %v879, %v1438
        %v1440 = vpop.f32.mrb[0].mxu0
        %1441 = vmatprep.mubr.bf16.mxu0 %v909
        %1442 = vmatmul.mubr.bf16.gmra.mrb[0].mxu0 %v908
        %v1443 = vpop.f32.mrb[0].mxu0
        %v1444 = vadd.f32 %v879, %v1443
        %v1445 = vpop.f32.mrb[0].mxu0
        %v1446 = vpop.f32.mrb[0].mxu0
        %v1447 = vadd.f32 %v879, %v1446
        %v1448 = vpop.f32.mrb[0].mxu0
        %1449 = vdwg.mxu0
        %1450 = vmatprep.subr.bf16.mxu0 0
        %1451 = vmatpush1.bf16.msra.mxu0 %v1257
        %1452 = vmatprep.subr.bf16.mxu0 0
        %1453 = vmatpush1.bf16.msra.mxu0 %v1258
        %1454 = vmatprep.subr.bf16.mxu0 0
        %1455 = vmatpush1.bf16.msra.mxu0 %v1259
        %1456 = vmatprep.subr.bf16.mxu0 0
        %1457 = vmatpush1.bf16.msra.mxu0 %v1260
        %1458 = vmatprep.subr.bf16.mxu0 0
        %1459 = vmatpush1.bf16.msra.mxu0 %v1261
        %1460 = vmatprep.subr.bf16.mxu0 0
        %1461 = vmatpush1.bf16.msra.mxu0 %v1262
        %1462 = vmatprep.subr.bf16.mxu0 0
        %1463 = vmatpush1.bf16.msra.mxu0 %v1263
        %1464 = vmatprep.subr.bf16.mxu0 0
        %1465 = vmatpush1.bf16.msra.mxu0 %v1264
        %1466 = vmatprep.subr.bf16.mxu0 0
        %1467 = vmatpush1.bf16.msra.mxu0 %v1265
        %1468 = vmatprep.subr.bf16.mxu0 0
        %1469 = vmatpush1.bf16.msra.mxu0 %v1266
        %1470 = vmatprep.subr.bf16.mxu0 0
        %1471 = vmatpush1.bf16.msra.mxu0 %v1267
        %1472 = vmatprep.subr.bf16.mxu0 0
        %1473 = vmatpush1.bf16.msra.mxu0 %v1268
        %1474 = vmatprep.subr.bf16.mxu0 0
        %1475 = vmatpush1.bf16.msra.mxu0 %v1269
        %1476 = vmatprep.subr.bf16.mxu0 0
        %1477 = vmatpush1.bf16.msra.mxu0 %v1270
        %1478 = vmatprep.subr.bf16.mxu0 0
        %1479 = vmatpush1.bf16.msra.mxu0 %v1271
        %1480 = vmatprep.subr.bf16.mxu0 0
        %1481 = vmatpush1.bf16.msra.mxu0 %v1272
        %1482 = vmatprep.mubr.bf16.mxu0 %v884
        %1483 = vmatmul.mubr.bf16.gmra.mrb[0].mxu0 %v883
        %v1484 = vpop.f32.mrb[0].mxu0
        %v1485 = vadd.f32 %v1420, %v1484
        %v1486 = vpop.f32.mrb[0].mxu0
        %v1487 = vpop.f32.mrb[0].mxu0
        %v1488 = vadd.f32 %v1423, %v1487
        %v1489 = vpop.f32.mrb[0].mxu0
        %1490 = vmatprep.mubr.bf16.mxu0 %v893
        %1491 = vmatmul.mubr.bf16.gmra.mrb[0].mxu0 %v892
        %v1492 = vpop.f32.mrb[0].mxu0
        %v1493 = vadd.f32 %v1428, %v1492
        %v1494 = vpop.f32.mrb[0].mxu0
        %v1495 = vpop.f32.mrb[0].mxu0
        %v1496 = vadd.f32 %v1431, %v1495
        %v1497 = vpop.f32.mrb[0].mxu0
        %1498 = vmatprep.mubr.bf16.mxu0 %v902
        %1499 = vmatmul.mubr.bf16.gmra.mrb[0].mxu0 %v901
        %v1500 = vpop.f32.mrb[0].mxu0
        %v1501 = vadd.f32 %v1436, %v1500
        %v1502 = vpop.f32.mrb[0].mxu0
        %v1503 = vpop.f32.mrb[0].mxu0
        %v1504 = vadd.f32 %v1439, %v1503
        %v1505 = vpop.f32.mrb[0].mxu0
        %1506 = vmatprep.mubr.bf16.mxu0 %v911
        %1507 = vmatmul.mubr.bf16.gmra.mrb[0].mxu0 %v910
        %v1508 = vpop.f32.mrb[0].mxu0
        %v1509 = vadd.f32 %v1444, %v1508
        %v1510 = vpop.f32.mrb[0].mxu0
        %v1511 = vpop.f32.mrb[0].mxu0
        %v1512 = vadd.f32 %v1447, %v1511
        %v1513 = vpop.f32.mrb[0].mxu0
        %1514 = vdwg.mxu0
        %1515 = vmatprep.subr.bf16.mxu0 0
        %1516 = vmatpush1.bf16.msra.mxu0 %v1273
        %1517 = vmatprep.subr.bf16.mxu0 0
        %1518 = vmatpush1.bf16.msra.mxu0 %v1274
        %1519 = vmatprep.subr.bf16.mxu0 0
        %1520 = vmatpush1.bf16.msra.mxu0 %v1275
        %1521 = vmatprep.subr.bf16.mxu0 0
        %1522 = vmatpush1.bf16.msra.mxu0 %v1276
        %1523 = vmatprep.subr.bf16.mxu0 0
        %1524 = vmatpush1.bf16.msra.mxu0 %v1277
        %1525 = vmatprep.subr.bf16.mxu0 0
        %1526 = vmatpush1.bf16.msra.mxu0 %v1278
        %1527 = vmatprep.subr.bf16.mxu0 0
        %1528 = vmatpush1.bf16.msra.mxu0 %v1279
        %1529 = vmatprep.subr.bf16.mxu0 0
        %1530 = vmatpush1.bf16.msra.mxu0 %v1280
        %1531 = vmatprep.subr.bf16.mxu0 0
        %1532 = vmatpush1.bf16.msra.mxu0 %v1281
        %1533 = vmatprep.subr.bf16.mxu0 0
        %1534 = vmatpush1.bf16.msra.mxu0 %v1282
        %1535 = vmatprep.subr.bf16.mxu0 0
        %1536 = vmatpush1.bf16.msra.mxu0 %v1283
        %1537 = vmatprep.subr.bf16.mxu0 0
        %1538 = vmatpush1.bf16.msra.mxu0 %v1284
        %1539 = vmatprep.subr.bf16.mxu0 0
        %1540 = vmatpush1.bf16.msra.mxu0 %v1285
        %1541 = vmatprep.subr.bf16.mxu0 0
        %1542 = vmatpush1.bf16.msra.mxu0 %v1286
        %1543 = vmatprep.subr.bf16.mxu0 0
        %1544 = vmatpush1.bf16.msra.mxu0 %v1287
        %1545 = vmatprep.subr.bf16.mxu0 0
        %1546 = vmatpush1.bf16.msra.mxu0 %v1288
        %1547 = vmatprep.mubr.bf16.mxu0 %v886
        %1548 = vmatmul.mubr.bf16.gmra.mrb[0].mxu0 %v885
        %v1549 = vpop.f32.mrb[0].mxu0
        %v1550 = vadd.f32 %v1485, %v1549
        %v1551 = vpop.f32.mrb[0].mxu0
        %v1552 = vpop.f32.mrb[0].mxu0
        %v1553 = vadd.f32 %v1488, %v1552
        %v1554 = vpop.f32.mrb[0].mxu0
        %1555 = vmatprep.mubr.bf16.mxu0 %v895
        %1556 = vmatmul.mubr.bf16.gmra.mrb[0].mxu0 %v894
        %v1557 = vpop.f32.mrb[0].mxu0
        %v1558 = vadd.f32 %v1493, %v1557
        %v1559 = vpop.f32.mrb[0].mxu0
        %v1560 = vpop.f32.mrb[0].mxu0
        %v1561 = vadd.f32 %v1496, %v1560
        %v1562 = vpop.f32.mrb[0].mxu0
        %1563 = vmatprep.mubr.bf16.mxu0 %v904
        %1564 = vmatmul.mubr.bf16.gmra.mrb[0].mxu0 %v903
        %v1565 = vpop.f32.mrb[0].mxu0
        %v1566 = vadd.f32 %v1501, %v1565
        %v1567 = vpop.f32.mrb[0].mxu0
        %v1568 = vpop.f32.mrb[0].mxu0
        %v1569 = vadd.f32 %v1504, %v1568
        %v1570 = vpop.f32.mrb[0].mxu0
        %1571 = vmatprep.mubr.bf16.mxu0 %v913
        %1572 = vmatmul.mubr.bf16.gmra.mrb[0].mxu0 %v912
        %v1573 = vpop.f32.mrb[0].mxu0
        %v1574 = vadd.f32 %v1509, %v1573
        %v1575 = vpop.f32.mrb[0].mxu0
        %v1576 = vpop.f32.mrb[0].mxu0
        %v1577 = vadd.f32 %v1512, %v1576
        %v1578 = vpop.f32.mrb[0].mxu0
        %1579 = vdwg.mxu0
        %1580 = vmatprep.subr.bf16.mxu0 0
        %1581 = vmatpush1.bf16.msra.mxu0 %v1289
        %1582 = vmatprep.subr.bf16.mxu0 0
        %1583 = vmatpush1.bf16.msra.mxu0 %v1290
        %1584 = vmatprep.subr.bf16.mxu0 0
        %1585 = vmatpush1.bf16.msra.mxu0 %v1291
        %1586 = vmatprep.subr.bf16.mxu0 0
        %1587 = vmatpush1.bf16.msra.mxu0 %v1292
        %1588 = vmatprep.subr.bf16.mxu0 0
        %1589 = vmatpush1.bf16.msra.mxu0 %v1293
        %1590 = vmatprep.subr.bf16.mxu0 0
        %1591 = vmatpush1.bf16.msra.mxu0 %v1294
        %1592 = vmatprep.subr.bf16.mxu0 0
        %1593 = vmatpush1.bf16.msra.mxu0 %v1295
        %1594 = vmatprep.subr.bf16.mxu0 0
        %1595 = vmatpush1.bf16.msra.mxu0 %v1296
        %1596 = vmatprep.subr.bf16.mxu0 0
        %1597 = vmatpush1.bf16.msra.mxu0 %v1297
        %1598 = vmatprep.subr.bf16.mxu0 0
        %1599 = vmatpush1.bf16.msra.mxu0 %v1298
        %1600 = vmatprep.subr.bf16.mxu0 0
        %1601 = vmatpush1.bf16.msra.mxu0 %v1299
        %1602 = vmatprep.subr.bf16.mxu0 0
        %1603 = vmatpush1.bf16.msra.mxu0 %v1300
        %1604 = vmatprep.subr.bf16.mxu0 0
        %1605 = vmatpush1.bf16.msra.mxu0 %v1301
        %1606 = vmatprep.subr.bf16.mxu0 0
        %1607 = vmatpush1.bf16.msra.mxu0 %v1302
        %1608 = vmatprep.subr.bf16.mxu0 0
        %1609 = vmatpush1.bf16.msra.mxu0 %v1303
        %1610 = vmatprep.subr.bf16.mxu0 0
        %1611 = vmatpush1.bf16.msra.mxu0 %v1304
        %1612 = vmatprep.mubr.bf16.mxu0 %v888
        %1613 = vmatmul.mubr.bf16.gmra.mrb[0].mxu0 %v887
        %v1614 = vpop.f32.mrb[0].mxu0
        %v1615 = vadd.f32 %v1550, %v1614
        %v1616 = vpop.f32.mrb[0].mxu0
        %v1617 = vpop.f32.mrb[0].mxu0
        %v1618 = vadd.f32 %v1553, %v1617
        %v1619 = vpop.f32.mrb[0].mxu0
        %1620 = vmatprep.mubr.bf16.mxu0 %v897
        %1621 = vmatmul.mubr.bf16.gmra.mrb[0].mxu0 %v896
        %v1622 = vpop.f32.mrb[0].mxu0
        %v1623 = vadd.f32 %v1558, %v1622
        %v1624 = vpop.f32.mrb[0].mxu0
        %v1625 = vpop.f32.mrb[0].mxu0
        %v1626 = vadd.f32 %v1561, %v1625
        %v1627 = vpop.f32.mrb[0].mxu0
        %1628 = vmatprep.mubr.bf16.mxu0 %v906
        %1629 = vmatmul.mubr.bf16.gmra.mrb[0].mxu0 %v905
        %v1630 = vpop.f32.mrb[0].mxu0
        %v1631 = vadd.f32 %v1566, %v1630
        %v1632 = vpop.f32.mrb[0].mxu0
        %v1633 = vpop.f32.mrb[0].mxu0
        %v1634 = vadd.f32 %v1569, %v1633
        %v1635 = vpop.f32.mrb[0].mxu0
        %1636 = vmatprep.mubr.bf16.mxu0 %v915
        %1637 = vmatmul.mubr.bf16.gmra.mrb[0].mxu0 %v914
        %v1638 = vpop.f32.mrb[0].mxu0
        %v1639 = vadd.f32 %v1574, %v1638
        %v1640 = vpop.f32.mrb[0].mxu0
        %v1641 = vpop.f32.mrb[0].mxu0
        %v1642 = vadd.f32 %v1577, %v1641
        %v1643 = vpop.f32.mrb[0].mxu0
        %1644 = vdwg.mxu0
        %1645 = vmatprep.subr.bf16.mxu0 0
        %1646 = vmatpush1.bf16.msra.mxu0 %v1305
        %1647 = vmatprep.subr.bf16.mxu0 0
        %1648 = vmatpush1.bf16.msra.mxu0 %v1306
        %1649 = vmatprep.subr.bf16.mxu0 0
        %1650 = vmatpush1.bf16.msra.mxu0 %v1307
        %1651 = vmatprep.subr.bf16.mxu0 0
        %1652 = vmatpush1.bf16.msra.mxu0 %v1308
        %1653 = vmatprep.subr.bf16.mxu0 0
        %1654 = vmatpush1.bf16.msra.mxu0 %v1309
        %1655 = vmatprep.subr.bf16.mxu0 0
        %1656 = vmatpush1.bf16.msra.mxu0 %v1310
        %1657 = vmatprep.subr.bf16.mxu0 0
        %1658 = vmatpush1.bf16.msra.mxu0 %v1311
        %1659 = vmatprep.subr.bf16.mxu0 0
        %1660 = vmatpush1.bf16.msra.mxu0 %v1312
        %1661 = vmatprep.subr.bf16.mxu0 0
        %1662 = vmatpush1.bf16.msra.mxu0 0
        %1663 = vmatprep.subr.bf16.mxu0 0
        %1664 = vmatpush1.bf16.msra.mxu0 0
        %1665 = vmatprep.subr.bf16.mxu0 0
        %1666 = vmatpush1.bf16.msra.mxu0 0
        %1667 = vmatprep.subr.bf16.mxu0 0
        %1668 = vmatpush1.bf16.msra.mxu0 0
        %1669 = vmatprep.subr.bf16.mxu0 0
        %1670 = vmatpush1.bf16.msra.mxu0 0
        %1671 = vmatprep.subr.bf16.mxu0 0
        %1672 = vmatpush1.bf16.msra.mxu0 0
        %1673 = vmatprep.subr.bf16.mxu0 0
        %1674 = vmatpush1.bf16.msra.mxu0 0
        %1675 = vmatprep.subr.bf16.mxu0 0
        %1676 = vmatpush1.bf16.msra.mxu0 0
        %1677 = vmatprep.mubr.bf16.mxu0 0
        %1678 = vmatmul.mubr.bf16.gmra.mrb[0].mxu0 %v889
        %v1679 = vpop.f32.mrb[0].mxu0
        %v1680 = vadd.f32 %v1615, %v1679
        %v1681 = vpop.f32.mrb[0].mxu0
        %v1682 = vpop.f32.mrb[0].mxu0
        %v1683 = vadd.f32 %v1618, %v1682
        %v1684 = vpop.f32.mrb[0].mxu0
        %1685 = vmatprep.mubr.bf16.mxu0 0
        %1686 = vmatmul.mubr.bf16.gmra.mrb[0].mxu0 %v898
        %v1687 = vpop.f32.mrb[0].mxu0
        %v1688 = vadd.f32 %v1623, %v1687
        %v1689 = vpop.f32.mrb[0].mxu0
        %v1690 = vpop.f32.mrb[0].mxu0
        %v1691 = vadd.f32 %v1626, %v1690
        %v1692 = vpop.f32.mrb[0].mxu0
        %1693 = vmatprep.mubr.bf16.mxu0 0
        %1694 = vmatmul.mubr.bf16.gmra.mrb[0].mxu0 %v907
        %v1695 = vpop.f32.mrb[0].mxu0
        %v1696 = vadd.f32 %v1631, %v1695
        %v1697 = vpop.f32.mrb[0].mxu0
        %v1698 = vpop.f32.mrb[0].mxu0
        %v1699 = vadd.f32 %v1634, %v1698
        %v1700 = vpop.f32.mrb[0].mxu0
        %1701 = vmatprep.mubr.bf16.mxu0 0
        %1702 = vmatmul.mubr.bf16.gmra.mrb[0].mxu0 %v916
        %v1703 = vpop.f32.mrb[0].mxu0
        %v1704 = vadd.f32 %v1639, %v1703
        %v1705 = vpop.f32.mrb[0].mxu0
        %v1706 = vpop.f32.mrb[0].mxu0
        %v1707 = vadd.f32 %v1642, %v1706
        %v1708 = vpop.f32.mrb[0].mxu0
        %1709 = vdwg.mxu0
        %v1710 = vmax.f32 %v1680, 0.0
        %v1711 = vmax.f32 %v1683, 0.0
        %v1712 = vmax.f32 %v1688, 0.0
        %v1713 = vmax.f32 %v1691, 0.0
        %v1714 = vmax.f32 %v1696, 0.0
        %v1715 = vmax.f32 %v1699, 0.0
        %v1716 = vmax.f32 %v1704, 0.0
        %v1717 = vmax.f32 %v1707, 0.0
        %v1718 = vpack.c.bf16 %v1710, %v1710
        %v1719 = vpack.c.bf16 %v1711, %v1711
        %v1720 = vpack.c.bf16 %v1712, %v1712
        %v1721 = vpack.c.bf16 %v1713, %v1713
        %v1722 = vpack.c.bf16 %v1714, %v1714
        %v1723 = vpack.c.bf16 %v1715, %v1715
        %v1724 = vpack.c.bf16 %v1716, %v1716
        %v1725 = vpack.c.bf16 %v1717, %v1717
        %v1727 = vshrl.u32 0, 16
        %v1729 = vrot.slane %v1727, 7
        %v1730 = vshll.u32 0, 16
        %v1732 = vor.u32 %v1729, %v1730
        %v1734 = vshrl.u32 %v1718, 16
        %v1736 = vrot.slane %v1734, 7
        %v1737 = vshll.u32 %v1718, 16
        %v1739 = vor.u32 %v1736, %v1737
        %v1741 = vshrl.u32 %v1719, 16
        %v1743 = vrot.slane %v1741, 7
        %v1744 = vshll.u32 %v1719, 16
        %v1746 = vor.u32 %v1743, %v1744
        %v1748 = vshrl.u32 %v1720, 16
        %v1750 = vrot.slane %v1748, 7
        %v1751 = vshll.u32 %v1720, 16
        %v1753 = vor.u32 %v1750, %v1751
        %v1755 = vshrl.u32 %v1721, 16
        %v1757 = vrot.slane %v1755, 7
        %v1758 = vshll.u32 %v1721, 16
        %v1760 = vor.u32 %v1757, %v1758
        %v1762 = vshrl.u32 %v1722, 16
        %v1764 = vrot.slane %v1762, 7
        %v1765 = vshll.u32 %v1722, 16
        %v1767 = vor.u32 %v1764, %v1765
        %v1769 = vshrl.u32 %v1723, 16
        %v1771 = vrot.slane %v1769, 7
        %v1772 = vshll.u32 %v1723, 16
        %v1774 = vor.u32 %v1771, %v1772
        %v1776 = vshrl.u32 %v1724, 16
        %v1778 = vrot.slane %v1776, 7
        %v1779 = vshll.u32 %v1724, 16
        %v1781 = vor.u32 %v1778, %v1779
        %v1783 = vshrl.u32 %v1725, 16
        %v1785 = vrot.slane %v1783, 7
        %v1786 = vshll.u32 %v1725, 16
        %v1788 = vor.u32 %v1785, %v1786
        %vm1798 = vcmask 1040384
        %vm1799 = vsmask.f32 256
        %vm1800 = vmand %vm1798, %vm1799
        %v1801 = vsel %vm1800, 0, %v1732
        %v1802 = vsel %vm1800, 0, %v1739
        %v1803 = vsel %vm1800, 0, %v1746
        %v1804 = vsel %vm1800, 0, %v1753
        %v1805 = vsel %vm1800, 0, %v1760
        %v1806 = vsel %vm1800, 0, %v1767
        %v1807 = vsel %vm1800, 0, %v1774
        %v1808 = vsel %vm1800, 0, %v1781
        %v1809 = vsel %vm1800, 0, %v1788
        %vm1810 = vcmask 1044480
        %vm1811 = vsmask.f32 4352
        %vm1812 = vmand %vm1810, %vm1811
        %v1813 = vsel %vm1812, %v1801, 0
        %v1814 = vsel %vm1812, %v1802, 0
        %v1815 = vsel %vm1812, %v1803, 0
        %v1816 = vsel %vm1812, %v1804, 0
        %v1817 = vsel %vm1812, %v1805, 0
        %v1818 = vsel %vm1812, %v1806, 0
        %v1819 = vsel %vm1812, %v1807, 0
        %v1820 = vsel %vm1812, %v1808, 0
        %v1821 = vsel %vm1812, %v1809, 0
        %v1823 = vshrl.u32 %v1813, 16
        %v1825 = vshll.u32 %v1813, 16
        %v1827 = vrot.slane %v1825, 1
        %v1828 = vor.u32 %v1823, %v1827
        %v1830 = vshrl.u32 %v1814, 16
        %v1832 = vshll.u32 %v1814, 16
        %v1834 = vrot.slane %v1832, 1
        %v1835 = vor.u32 %v1830, %v1834
        %v1837 = vshrl.u32 %v1815, 16
        %v1839 = vshll.u32 %v1815, 16
        %v1841 = vrot.slane %v1839, 1
        %v1842 = vor.u32 %v1837, %v1841
        %v1844 = vshrl.u32 %v1816, 16
        %v1846 = vshll.u32 %v1816, 16
        %v1848 = vrot.slane %v1846, 1
        %v1849 = vor.u32 %v1844, %v1848
        %v1851 = vshrl.u32 %v1817, 16
        %v1853 = vshll.u32 %v1817, 16
        %v1855 = vrot.slane %v1853, 1
        %v1856 = vor.u32 %v1851, %v1855
        %v1858 = vshrl.u32 %v1818, 16
        %v1860 = vshll.u32 %v1818, 16
        %v1862 = vrot.slane %v1860, 1
        %v1863 = vor.u32 %v1858, %v1862
        %v1865 = vshrl.u32 %v1819, 16
        %v1867 = vshll.u32 %v1819, 16
        %v1869 = vrot.slane %v1867, 1
        %v1870 = vor.u32 %v1865, %v1869
        %v1872 = vshrl.u32 %v1820, 16
        %v1874 = vshll.u32 %v1820, 16
        %v1876 = vrot.slane %v1874, 1
        %v1877 = vor.u32 %v1872, %v1876
        %v1886 = vrot.slane %v1813, 1
        %v1887 = vrot.slane %v1814, 1
        %v1888 = vrot.slane %v1815, 1
        %v1889 = vrot.slane %v1816, 1
        %v1890 = vrot.slane %v1817, 1
        %v1891 = vrot.slane %v1818, 1
        %v1892 = vrot.slane %v1819, 1
        %v1893 = vrot.slane %v1820, 1
        %v1895 = vshrl.u32 %v1821, 16
        %v1897 = vshll.u32 %v1821, 16
        %v1899 = vrot.slane %v1897, 1
        %v1900 = vor.u32 %v1895, %v1899
        %v1902 = vrot.slane %v1821, 1
        %v1903 = vunpack.c.l.b16 %v1813
        %v1904 = vunpack.c.l.b16 %v1828
        %v1905 = vunpack.c.l.b16 %v1886
        %v1906 = vunpack.c.l.b16 %v1814
        %v1907 = vunpack.c.l.b16 %v1835
        %v1908 = vunpack.c.l.b16 %v1887
        %v1909 = vunpack.c.l.b16 %v1815
        %v1910 = vunpack.c.l.b16 %v1842
        %v1911 = vunpack.c.l.b16 %v1888
        %v1912 = vunpack.c.l.b16 %v1816
        %v1913 = vunpack.c.l.b16 %v1849
        %v1914 = vunpack.c.l.b16 %v1889
        %v1915 = vunpack.c.l.b16 %v1817
        %v1916 = vunpack.c.l.b16 %v1856
        %v1917 = vunpack.c.l.b16 %v1890
        %v1918 = vunpack.c.l.b16 %v1818
        %v1919 = vunpack.c.l.b16 %v1863
        %v1920 = vunpack.c.l.b16 %v1891
        %v1921 = vunpack.c.l.b16 %v1819
        %v1922 = vunpack.c.l.b16 %v1870
        %v1923 = vunpack.c.l.b16 %v1892
        %v1924 = vunpack.c.l.b16 %v1820
        %v1925 = vunpack.c.l.b16 %v1877
        %v1926 = vunpack.c.l.b16 %v1893
        %v1927 = vunpack.c.l.b16 %v1821
        %v1928 = vunpack.c.l.b16 %v1900
        %v1929 = vunpack.c.l.b16 %v1902
        %v1930 = vld [vmem:[#allocation2] sm:$0xf]
        %v1931 = vld [vmem:[#allocation2 + $0x4] sm:$0xf]
        %v1932 = vld [vmem:[#allocation2 + $0x8] sm:$0xf]
        %v1933 = vld [vmem:[#allocation2 + $0xc] sm:$0xf]
        %v1934 = vld [vmem:[#allocation2 + $0x10] sm:$0xf]
        %v1935 = vld [vmem:[#allocation2 + $0x14] sm:$0xf]
        %v1936 = vld [vmem:[#allocation2 + $0x18] sm:$0xf]
        %v1937 = vld [vmem:[#allocation2 + $0x1c] sm:$0xf]
        %v1938 = vld [vmem:[#allocation2 + $0x20] sm:$0xf]
        %v1939 = vld [vmem:[#allocation2 + $0x24] sm:$0xf]
        %v1940 = vld [vmem:[#allocation2 + $0x28] sm:$0xf]
        %v1941 = vld [vmem:[#allocation2 + $0x2c] sm:$0xf]
        %v1942 = vld [vmem:[#allocation2 + $0x30] sm:$0xf]
        %v1943 = vld [vmem:[#allocation2 + $0x34] sm:$0xf]
        %v1944 = vld [vmem:[#allocation2 + $0x38] sm:$0xf]
        %v1945 = vld [vmem:[#allocation2 + $0x3c] sm:$0xf]
        %v1946 = vld [vmem:[#allocation2 + $0x40] sm:$0xf]
        %v1947 = vld [vmem:[#allocation2 + $0x44] sm:$0xf]
        %v1948 = vld [vmem:[#allocation2 + $0x48] sm:$0xf]
        %v1949 = vld [vmem:[#allocation2 + $0x4c] sm:$0xf]
        %v1950 = vld [vmem:[#allocation2 + $0x50] sm:$0xf]
        %v1951 = vld [vmem:[#allocation2 + $0x54] sm:$0xf]
        %v1952 = vld [vmem:[#allocation2 + $0x58] sm:$0xf]
        %v1953 = vld [vmem:[#allocation2 + $0x5c] sm:$0xf]
        %v1954 = vld [vmem:[#allocation2 + $0x60] sm:$0xf]
        %v1955 = vld [vmem:[#allocation2 + $0x64] sm:$0xf]
        %v1956 = vld [vmem:[#allocation2 + $0x68] sm:$0xf]
        %v1957 = vld [vmem:[#allocation2 + $0x6c] sm:$0xf]
        %v1958 = vld [vmem:[#allocation2 + $0x70] sm:$0xf]
        %v1959 = vld [vmem:[#allocation2 + $0x74] sm:$0xf]
        %v1960 = vld [vmem:[#allocation2 + $0x78] sm:$0xf]
        %v1961 = vld [vmem:[#allocation2 + $0x7c] sm:$0xf]
        %v1962 = vld [vmem:[#allocation2 + $0x80] sm:$0xf]
        %v1963 = vld [vmem:[#allocation2 + $0x84] sm:$0xf]
        %v1964 = vld [vmem:[#allocation2 + $0x88] sm:$0xf]
        %v1965 = vld [vmem:[#allocation2 + $0x8c] sm:$0xf]
        %v1966 = vld [vmem:[#allocation2 + $0x90] sm:$0xf]
        %v1967 = vld [vmem:[#allocation2 + $0x94] sm:$0xf]
        %v1968 = vld [vmem:[#allocation2 + $0x98] sm:$0xf]
        %v1969 = vld [vmem:[#allocation2 + $0x9c] sm:$0xf]
        %v1970 = vld [vmem:[#allocation2 + $0xa0] sm:$0xf]
        %v1971 = vld [vmem:[#allocation2 + $0xa4] sm:$0xf]
        %v1972 = vld [vmem:[#allocation2 + $0xa8] sm:$0xf]
        %v1973 = vld [vmem:[#allocation2 + $0xac] sm:$0xf]
        %v1974 = vld [vmem:[#allocation2 + $0xb0] sm:$0xf]
        %v1975 = vld [vmem:[#allocation2 + $0xb4] sm:$0xf]
        %v1976 = vld [vmem:[#allocation2 + $0xb8] sm:$0xf]
        %v1977 = vld [vmem:[#allocation2 + $0xbc] sm:$0xf]
        %v1978 = vld [vmem:[#allocation2 + $0xc0] sm:$0xf]
        %v1979 = vld [vmem:[#allocation2 + $0xc4] sm:$0xf]
        %v1980 = vld [vmem:[#allocation2 + $0xc8] sm:$0xf]
        %v1981 = vld [vmem:[#allocation2 + $0xcc] sm:$0xf]
        %v1982 = vld [vmem:[#allocation2 + $0xd0] sm:$0xf]
        %v1983 = vld [vmem:[#allocation2 + $0xd4] sm:$0xf]
        %v1984 = vld [vmem:[#allocation2 + $0xd8] sm:$0xf]
        %v1985 = vld [vmem:[#allocation2 + $0xdc] sm:$0xf]
        %v1986 = vld [vmem:[#allocation2 + $0xe0] sm:$0xf]
        %v1987 = vld [vmem:[#allocation2 + $0xe4] sm:$0xf]
        %v1988 = vld [vmem:[#allocation2 + $0xe8] sm:$0xf]
        %v1989 = vld [vmem:[#allocation2 + $0xec] sm:$0xf]
        %v1990 = vld [vmem:[#allocation2 + $0xf0] sm:$0xf]
        %v1991 = vld [vmem:[#allocation2 + $0xf4] sm:$0xf]
        %v1992 = vld [vmem:[#allocation2 + $0xf8] sm:$0xf]
        %v1993 = vld [vmem:[#allocation2 + $0xfc] sm:$0xf]
        %v1994 = vld [vmem:[#allocation2 + $0x100] sm:$0xf]
        %v1995 = vld [vmem:[#allocation2 + $0x104] sm:$0xf]
        %v1996 = vld [vmem:[#allocation2 + $0x108] sm:$0xf]
        %v1997 = vld [vmem:[#allocation2 + $0x10c] sm:$0xf]
        %v1998 = vld [vmem:[#allocation2 + $0x110] sm:$0xf]
        %v1999 = vld [vmem:[#allocation2 + $0x114] sm:$0xf]
        %v2000 = vld [vmem:[#allocation2 + $0x118] sm:$0xf]
        %v2001 = vld [vmem:[#allocation2 + $0x11c] sm:$0xf]
        %v2002 = vld [vmem:[#allocation2 + $0x120] sm:$0xf]
        %v2003 = vld [vmem:[#allocation2 + $0x124] sm:$0xf]
        %v2004 = vld [vmem:[#allocation2 + $0x128] sm:$0xf]
        %v2005 = vld [vmem:[#allocation2 + $0x12c] sm:$0xf]
        %v2006 = vld [vmem:[#allocation2 + $0x130] sm:$0xf]
        %v2007 = vld [vmem:[#allocation2 + $0x134] sm:$0xf]
        %v2008 = vld [vmem:[#allocation2 + $0x138] sm:$0xf]
        %v2009 = vld [vmem:[#allocation2 + $0x13c] sm:$0xf]
        %v2010 = vld [vmem:[#allocation2 + $0x140] sm:$0xf]
        %v2011 = vld [vmem:[#allocation2 + $0x144] sm:$0xf]
        %v2012 = vld [vmem:[#allocation2 + $0x148] sm:$0xf]
        %v2013 = vld [vmem:[#allocation2 + $0x14c] sm:$0xf]
        %v2014 = vld [vmem:[#allocation2 + $0x150] sm:$0xf]
        %v2015 = vld [vmem:[#allocation2 + $0x154] sm:$0xf]
        %v2016 = vld [vmem:[#allocation2 + $0x158] sm:$0xf]
        %v2017 = vld [vmem:[#allocation2 + $0x15c] sm:$0xf]
        %v2018 = vld [vmem:[#allocation2 + $0x160] sm:$0xf]
        %v2019 = vld [vmem:[#allocation2 + $0x164] sm:$0xf]
        %v2020 = vld [vmem:[#allocation2 + $0x168] sm:$0xf]
        %v2021 = vld [vmem:[#allocation2 + $0x16c] sm:$0xf]
        %v2022 = vld [vmem:[#allocation2 + $0x170] sm:$0xf]
        %v2023 = vld [vmem:[#allocation2 + $0x174] sm:$0xf]
        %v2024 = vld [vmem:[#allocation2 + $0x178] sm:$0xf]
        %v2025 = vld [vmem:[#allocation2 + $0x17c] sm:$0xf]
        %v2026 = vld [vmem:[#allocation2 + $0x180] sm:$0xf]
        %v2027 = vld [vmem:[#allocation2 + $0x184] sm:$0xf]
        %v2028 = vld [vmem:[#allocation2 + $0x188] sm:$0xf]
        %v2029 = vld [vmem:[#allocation2 + $0x18c] sm:$0xf]
        %v2030 = vld [vmem:[#allocation2 + $0x190] sm:$0xf]
        %v2031 = vld [vmem:[#allocation2 + $0x194] sm:$0xf]
        %v2032 = vld [vmem:[#allocation2 + $0x198] sm:$0xf]
        %v2033 = vld [vmem:[#allocation2 + $0x19c] sm:$0xf]
        %v2034 = vld [vmem:[#allocation2 + $0x1a0] sm:$0xf]
        %v2035 = vld [vmem:[#allocation2 + $0x1a4] sm:$0xf]
        %v2036 = vld [vmem:[#allocation2 + $0x1a8] sm:$0xf]
        %v2037 = vld [vmem:[#allocation2 + $0x1ac] sm:$0xf]
        %v2038 = vld [vmem:[#allocation2 + $0x1b0] sm:$0xf]
        %v2039 = vld [vmem:[#allocation2 + $0x1b4] sm:$0xf]
        %v2040 = vld [vmem:[#allocation2 + $0x1b8] sm:$0xf]
        %v2041 = vld [vmem:[#allocation2 + $0x1bc] sm:$0xf]
        %v2042 = vld [vmem:[#allocation2 + $0x1c0] sm:$0xf]
        %v2043 = vld [vmem:[#allocation2 + $0x1c4] sm:$0xf]
        %v2044 = vld [vmem:[#allocation2 + $0x1c8] sm:$0xf]
        %v2045 = vld [vmem:[#allocation2 + $0x1cc] sm:$0xf]
        %v2046 = vld [vmem:[#allocation2 + $0x1d0] sm:$0xf]
        %v2047 = vld [vmem:[#allocation2 + $0x1d4] sm:$0xf]
        %v2048 = vld [vmem:[#allocation2 + $0x1d8] sm:$0xf]
        %v2049 = vld [vmem:[#allocation2 + $0x1dc] sm:$0xf]
        %v2050 = vld [vmem:[#allocation2 + $0x1e0] sm:$0xf]
        %v2051 = vld [vmem:[#allocation2 + $0x1e4] sm:$0xf]
        %v2052 = vld [vmem:[#allocation2 + $0x1e8] sm:$0xf]
        %v2053 = vld [vmem:[#allocation2 + $0x1ec] sm:$0xf]
        %v2054 = vld [vmem:[#allocation2 + $0x1f0] sm:$0xf]
        %v2055 = vld [vmem:[#allocation2 + $0x1f4] sm:$0xf]
        %v2056 = vld [vmem:[#allocation2 + $0x1f8] sm:$0xf]
        %v2057 = vld [vmem:[#allocation2 + $0x1fc] sm:$0xf]
        %v2058 = vld [vmem:[#allocation2 + $0x200] sm:$0xf]
        %v2059 = vld [vmem:[#allocation2 + $0x204] sm:$0xf]
        %v2060 = vld [vmem:[#allocation2 + $0x208] sm:$0xf]
        %v2061 = vld [vmem:[#allocation2 + $0x20c] sm:$0xf]
        %v2062 = vld [vmem:[#allocation2 + $0x210] sm:$0xf]
        %v2063 = vld [vmem:[#allocation2 + $0x214] sm:$0xf]
        %v2064 = vld [vmem:[#allocation2 + $0x218] sm:$0xf]
        %v2065 = vld [vmem:[#allocation2 + $0x21c] sm:$0xf]
        %v2066 = vld [vmem:[#allocation2 + $0x220] sm:$0xf]
        %v2067 = vld [vmem:[#allocation2 + $0x224] sm:$0xf]
        %v2068 = vld [vmem:[#allocation2 + $0x228] sm:$0xf]
        %v2069 = vld [vmem:[#allocation2 + $0x22c] sm:$0xf]
        %v2070 = vld [vmem:[#allocation2 + $0x230] sm:$0xf]
        %v2071 = vld [vmem:[#allocation2 + $0x234] sm:$0xf]
        %v2072 = vld [vmem:[#allocation2 + $0x238] sm:$0xf]
        %v2073 = vld [vmem:[#allocation2 + $0x23c] sm:$0xf]
        %v2074 = vld [vmem:[%s4] sm:$0x1]
        %v2076 = vlaneseq
        %v2077 = vshrl.u32 %v2076, 7
        %v2078 = vsub.s32 0, %v2077
        %v2079 = vrot.slane %v2074, %v2078
        %v2081 = vpack.c.b16 %v1906, %v1903
        %v2082 = vpack.c.b16 %v1907, %v1904
        %v2083 = vpack.c.b16 %v1908, %v1905
        %v2084 = vpack.c.b16 %v1909, %v1906
        %v2085 = vpack.c.b16 %v1910, %v1907
        %v2086 = vpack.c.b16 %v1911, %v1908
        %v2087 = vpack.c.b16 %v1912, %v1909
        %v2088 = vpack.c.b16 %v1913, %v1910
        %v2089 = vpack.c.b16 %v1914, %v1911
        %v2090 = vpack.c.b16 %v1915, %v1912
        %v2091 = vpack.c.b16 %v1916, %v1913
        %v2092 = vpack.c.b16 %v1917, %v1914
        %v2093 = vpack.c.b16 %v1918, %v1915
        %v2094 = vpack.c.b16 %v1919, %v1916
        %v2095 = vpack.c.b16 %v1920, %v1917
        %v2096 = vpack.c.b16 %v1921, %v1918
        %v2097 = vpack.c.b16 %v1922, %v1919
        %v2098 = vpack.c.b16 %v1923, %v1920
        %v2099 = vpack.c.b16 %v1924, %v1921
        %v2100 = vpack.c.b16 %v1925, %v1922
        %v2101 = vpack.c.b16 %v1926, %v1923
        %v2102 = vpack.c.b16 %v1927, %v1924
        %v2103 = vpack.c.b16 %v1928, %v1925
        %v2104 = vpack.c.b16 %v1929, %v1926
        %v2105 = vpack.c.b16 %v1903, %v1927
        %v2106 = vpack.c.b16 %v1904, %v1928
        %v2107 = vpack.c.b16 %v1905, %v1929
        %v2279 = vunpack.c.l.b16 %v1930
        %v2280 = vunpack.c.l.b16 %v1931
        %v2281 = vunpack.c.l.b16 %v1932
        %v2282 = vunpack.c.l.b16 %v1933
        %v2283 = vunpack.c.l.b16 %v1934
        %v2284 = vunpack.c.l.b16 %v1935
        %v2285 = vunpack.c.l.b16 %v1936
        %v2286 = vunpack.c.l.b16 %v1937
        %v2287 = vunpack.c.l.b16 %v1938
        %v2288 = vunpack.c.l.b16 %v1939
        %v2289 = vunpack.c.l.b16 %v1940
        %v2290 = vunpack.c.l.b16 %v1941
        %v2291 = vunpack.c.l.b16 %v1942
        %v2292 = vunpack.c.l.b16 %v1943
        %v2293 = vunpack.c.l.b16 %v1944
        %v2294 = vunpack.c.l.b16 %v1945
        %v2295 = vunpack.c.l.b16 %v1946
        %v2296 = vunpack.c.l.b16 %v1947
        %v2297 = vunpack.c.l.b16 %v1948
        %v2298 = vunpack.c.l.b16 %v1949
        %v2299 = vunpack.c.l.b16 %v1950
        %v2300 = vunpack.c.l.b16 %v1951
        %v2301 = vunpack.c.l.b16 %v1952
        %v2302 = vunpack.c.l.b16 %v1953
        %v2303 = vunpack.c.l.b16 %v1954
        %v2304 = vunpack.c.l.b16 %v1955
        %v2305 = vunpack.c.l.b16 %v1956
        %v2306 = vunpack.c.l.b16 %v1957
        %v2307 = vunpack.c.l.b16 %v1958
        %v2308 = vunpack.c.l.b16 %v1959
        %v2309 = vunpack.c.l.b16 %v1960
        %v2310 = vunpack.c.l.b16 %v1961
        %v2311 = vunpack.c.l.b16 %v1962
        %v2312 = vunpack.c.l.b16 %v1963
        %v2313 = vunpack.c.l.b16 %v1964
        %v2314 = vunpack.c.l.b16 %v1965
        %v2315 = vunpack.c.l.b16 %v1966
        %v2316 = vunpack.c.l.b16 %v1967
        %v2317 = vunpack.c.l.b16 %v1968
        %v2318 = vunpack.c.l.b16 %v1969
        %v2319 = vunpack.c.l.b16 %v1970
        %v2320 = vunpack.c.l.b16 %v1971
        %v2321 = vunpack.c.l.b16 %v1972
        %v2322 = vunpack.c.l.b16 %v1973
        %v2323 = vunpack.c.l.b16 %v1974
        %v2324 = vunpack.c.l.b16 %v1975
        %v2325 = vunpack.c.l.b16 %v1976
        %v2326 = vunpack.c.l.b16 %v1977
        %v2327 = vunpack.c.l.b16 %v1978
        %v2328 = vunpack.c.l.b16 %v1979
        %v2329 = vunpack.c.l.b16 %v1980
        %v2330 = vunpack.c.l.b16 %v1981
        %v2331 = vunpack.c.l.b16 %v1982
        %v2332 = vunpack.c.l.b16 %v1983
        %v2333 = vunpack.c.l.b16 %v1984
        %v2334 = vunpack.c.l.b16 %v1985
        %v2335 = vunpack.c.l.b16 %v1986
        %v2336 = vunpack.c.l.b16 %v1987
        %v2337 = vunpack.c.l.b16 %v1988
        %v2338 = vunpack.c.l.b16 %v1989
        %v2339 = vunpack.c.l.b16 %v1990
        %v2340 = vunpack.c.l.b16 %v1991
        %v2341 = vunpack.c.l.b16 %v1992
        %v2342 = vunpack.c.l.b16 %v1993
        %v2343 = vunpack.c.l.b16 %v1994
        %v2344 = vunpack.c.l.b16 %v1995
        %v2345 = vunpack.c.l.b16 %v1996
        %v2346 = vunpack.c.l.b16 %v1997
        %v2347 = vunpack.c.l.b16 %v1998
        %v2348 = vunpack.c.l.b16 %v1999
        %v2349 = vunpack.c.l.b16 %v2000
        %v2350 = vunpack.c.l.b16 %v2001
        %v2351 = vunpack.c.l.b16 %v2002
        %v2352 = vunpack.c.l.b16 %v2003
        %v2353 = vunpack.c.l.b16 %v2004
        %v2354 = vunpack.c.l.b16 %v2005
        %v2355 = vunpack.c.l.b16 %v2006
        %v2356 = vunpack.c.l.b16 %v2007
        %v2357 = vunpack.c.l.b16 %v2008
        %v2358 = vunpack.c.l.b16 %v2009
        %v2359 = vunpack.c.l.b16 %v2010
        %v2360 = vunpack.c.l.b16 %v2011
        %v2361 = vunpack.c.l.b16 %v2012
        %v2362 = vunpack.c.l.b16 %v2013
        %v2363 = vunpack.c.l.b16 %v2014
        %v2364 = vunpack.c.l.b16 %v2015
        %v2365 = vunpack.c.l.b16 %v2016
        %v2366 = vunpack.c.l.b16 %v2017
        %v2367 = vunpack.c.l.b16 %v2018
        %v2368 = vunpack.c.l.b16 %v2019
        %v2369 = vunpack.c.l.b16 %v2020
        %v2370 = vunpack.c.l.b16 %v2021
        %v2371 = vunpack.c.l.b16 %v2022
        %v2372 = vunpack.c.l.b16 %v2023
        %v2373 = vunpack.c.l.b16 %v2024
        %v2374 = vunpack.c.l.b16 %v2025
        %v2375 = vunpack.c.l.b16 %v2026
        %v2376 = vunpack.c.l.b16 %v2027
        %v2377 = vunpack.c.l.b16 %v2028
        %v2378 = vunpack.c.l.b16 %v2029
        %v2379 = vunpack.c.l.b16 %v2030
        %v2380 = vunpack.c.l.b16 %v2031
        %v2381 = vunpack.c.l.b16 %v2032
        %v2382 = vunpack.c.l.b16 %v2033
        %v2383 = vunpack.c.l.b16 %v2034
        %v2384 = vunpack.c.l.b16 %v2035
        %v2385 = vunpack.c.l.b16 %v2036
        %v2386 = vunpack.c.l.b16 %v2037
        %v2387 = vunpack.c.l.b16 %v2038
        %v2388 = vunpack.c.l.b16 %v2039
        %v2389 = vunpack.c.l.b16 %v2040
        %v2390 = vunpack.c.l.b16 %v2041
        %v2391 = vunpack.c.l.b16 %v2042
        %v2392 = vunpack.c.l.b16 %v2043
        %v2393 = vunpack.c.l.b16 %v2044
        %v2394 = vunpack.c.l.b16 %v2045
        %v2395 = vunpack.c.l.b16 %v2046
        %v2396 = vunpack.c.l.b16 %v2047
        %v2397 = vunpack.c.l.b16 %v2048
        %v2398 = vunpack.c.l.b16 %v2049
        %v2399 = vunpack.c.l.b16 %v2050
        %v2400 = vunpack.c.l.b16 %v2051
        %v2401 = vunpack.c.l.b16 %v2052
        %v2402 = vunpack.c.l.b16 %v2053
        %v2403 = vunpack.c.l.b16 %v2054
        %v2404 = vunpack.c.l.b16 %v2055
        %v2405 = vunpack.c.l.b16 %v2056
        %v2406 = vunpack.c.l.b16 %v2057
        %v2407 = vunpack.c.l.b16 %v2058
        %v2408 = vunpack.c.l.b16 %v2059
        %v2409 = vunpack.c.l.b16 %v2060
        %v2410 = vunpack.c.l.b16 %v2061
        %v2411 = vunpack.c.l.b16 %v2062
        %v2412 = vunpack.c.l.b16 %v2063
        %v2413 = vunpack.c.l.b16 %v2064
        %v2414 = vunpack.c.l.b16 %v2065
        %v2415 = vunpack.c.l.b16 %v2066
        %v2416 = vunpack.c.l.b16 %v2067
        %v2417 = vunpack.c.l.b16 %v2068
        %v2418 = vunpack.c.l.b16 %v2069
        %v2419 = vunpack.c.l.b16 %v2070
        %v2420 = vunpack.c.l.b16 %v2071
        %v2421 = vunpack.c.l.b16 %v2072
        %v2422 = vunpack.c.l.b16 %v2073
        %v2423 = vpack.c.b16 %v2280, %v2279
        %v2424 = vpack.c.b16 %v2282, %v2281
        %v2425 = vpack.c.b16 %v2284, %v2283
        %v2426 = vpack.c.b16 %v2286, %v2285
        %v2427 = vpack.c.b16 %v2288, %v2287
        %v2428 = vpack.c.b16 %v2290, %v2289
        %v2429 = vpack.c.b16 %v2292, %v2291
        %v2430 = vpack.c.b16 %v2294, %v2293
        %v2431 = vpack.c.b16 %v2296, %v2295
        %v2432 = vpack.c.b16 %v2298, %v2297
        %v2433 = vpack.c.b16 %v2300, %v2299
        %v2434 = vpack.c.b16 %v2302, %v2301
        %v2435 = vpack.c.b16 %v2304, %v2303
        %v2436 = vpack.c.b16 %v2306, %v2305
        %v2437 = vpack.c.b16 %v2308, %v2307
        %v2438 = vpack.c.b16 %v2310, %v2309
        %v2439 = vpack.c.b16 %v2312, %v2311
        %v2440 = vpack.c.b16 %v2314, %v2313
        %v2441 = vpack.c.b16 %v2316, %v2315
        %v2442 = vpack.c.b16 %v2318, %v2317
        %v2443 = vpack.c.b16 %v2320, %v2319
        %v2444 = vpack.c.b16 %v2322, %v2321
        %v2445 = vpack.c.b16 %v2324, %v2323
        %v2446 = vpack.c.b16 %v2326, %v2325
        %v2447 = vpack.c.b16 %v2328, %v2327
        %v2448 = vpack.c.b16 %v2330, %v2329
        %v2449 = vpack.c.b16 %v2332, %v2331
        %v2450 = vpack.c.b16 %v2334, %v2333
        %v2451 = vpack.c.b16 %v2336, %v2335
        %v2452 = vpack.c.b16 %v2338, %v2337
        %v2453 = vpack.c.b16 %v2340, %v2339
        %v2454 = vpack.c.b16 %v2342, %v2341
        %v2455 = vpack.c.b16 %v2344, %v2343
        %v2456 = vpack.c.b16 %v2346, %v2345
        %v2457 = vpack.c.b16 %v2348, %v2347
        %v2458 = vpack.c.b16 %v2350, %v2349
        %v2459 = vpack.c.b16 %v2352, %v2351
        %v2460 = vpack.c.b16 %v2354, %v2353
        %v2461 = vpack.c.b16 %v2356, %v2355
        %v2462 = vpack.c.b16 %v2358, %v2357
        %v2463 = vpack.c.b16 %v2360, %v2359
        %v2464 = vpack.c.b16 %v2362, %v2361
        %v2465 = vpack.c.b16 %v2364, %v2363
        %v2466 = vpack.c.b16 %v2366, %v2365
        %v2467 = vpack.c.b16 %v2368, %v2367
        %v2468 = vpack.c.b16 %v2370, %v2369
        %v2469 = vpack.c.b16 %v2372, %v2371
        %v2470 = vpack.c.b16 %v2374, %v2373
        %v2471 = vpack.c.b16 %v2376, %v2375
        %v2472 = vpack.c.b16 %v2378, %v2377
        %v2473 = vpack.c.b16 %v2380, %v2379
        %v2474 = vpack.c.b16 %v2382, %v2381
        %v2475 = vpack.c.b16 %v2384, %v2383
        %v2476 = vpack.c.b16 %v2386, %v2385
        %v2477 = vpack.c.b16 %v2388, %v2387
        %v2478 = vpack.c.b16 %v2390, %v2389
        %v2479 = vpack.c.b16 %v2392, %v2391
        %v2480 = vpack.c.b16 %v2394, %v2393
        %v2481 = vpack.c.b16 %v2396, %v2395
        %v2482 = vpack.c.b16 %v2398, %v2397
        %v2483 = vpack.c.b16 %v2400, %v2399
        %v2484 = vpack.c.b16 %v2402, %v2401
        %v2485 = vpack.c.b16 %v2404, %v2403
        %v2486 = vpack.c.b16 %v2406, %v2405
        %v2487 = vpack.c.b16 %v2408, %v2407
        %v2488 = vpack.c.b16 %v2410, %v2409
        %v2489 = vpack.c.b16 %v2412, %v2411
        %v2490 = vpack.c.b16 %v2414, %v2413
        %v2491 = vpack.c.b16 %v2416, %v2415
        %v2492 = vpack.c.b16 %v2418, %v2417
        %v2493 = vpack.c.b16 %v2420, %v2419
        %v2494 = vpack.c.b16 %v2422, %v2421
        %2567 = vmatprep.subr.bf16.mxu0 0
        %2568 = vmatpush1.bf16.msra.mxu0 %v2423
        %2569 = vmatprep.subr.bf16.mxu0 0
        %2570 = vmatpush1.bf16.msra.mxu0 %v2424
        %2571 = vmatprep.subr.bf16.mxu0 0
        %2572 = vmatpush1.bf16.msra.mxu0 %v2425
        %2573 = vmatprep.subr.bf16.mxu0 0
        %2574 = vmatpush1.bf16.msra.mxu0 %v2426
        %2575 = vmatprep.subr.bf16.mxu0 0
        %2576 = vmatpush1.bf16.msra.mxu0 %v2427
        %2577 = vmatprep.subr.bf16.mxu0 0
        %2578 = vmatpush1.bf16.msra.mxu0 %v2428
        %2579 = vmatprep.subr.bf16.mxu0 0
        %2580 = vmatpush1.bf16.msra.mxu0 %v2429
        %2581 = vmatprep.subr.bf16.mxu0 0
        %2582 = vmatpush1.bf16.msra.mxu0 %v2430
        %2583 = vmatprep.subr.bf16.mxu0 0
        %2584 = vmatpush1.bf16.msra.mxu0 %v2431
        %2585 = vmatprep.subr.bf16.mxu0 0
        %2586 = vmatpush1.bf16.msra.mxu0 %v2432
        %2587 = vmatprep.subr.bf16.mxu0 0
        %2588 = vmatpush1.bf16.msra.mxu0 %v2433
        %2589 = vmatprep.subr.bf16.mxu0 0
        %2590 = vmatpush1.bf16.msra.mxu0 %v2434
        %2591 = vmatprep.subr.bf16.mxu0 0
        %2592 = vmatpush1.bf16.msra.mxu0 %v2435
        %2593 = vmatprep.subr.bf16.mxu0 0
        %2594 = vmatpush1.bf16.msra.mxu0 %v2436
        %2595 = vmatprep.subr.bf16.mxu0 0
        %2596 = vmatpush1.bf16.msra.mxu0 %v2437
        %2597 = vmatprep.subr.bf16.mxu0 0
        %2598 = vmatpush1.bf16.msra.mxu0 %v2438
        %2599 = vmatprep.mubr.bf16.mxu0 %v2082
        %2600 = vmatmul.mubr.bf16.gmra.mrb[0].mxu0 %v2081
        %v2601 = vpop.f32.mrb[0].mxu0
        %v2602 = vadd.f32 %v2079, %v2601
        %v2603 = vpop.f32.mrb[0].mxu0
        %v2604 = vpop.f32.mrb[0].mxu0
        %v2605 = vadd.f32 %v2079, %v2604
        %v2606 = vpop.f32.mrb[0].mxu0
        %2607 = vmatprep.mubr.bf16.mxu0 %v2088
        %2608 = vmatmul.mubr.bf16.gmra.mrb[0].mxu0 %v2087
        %v2609 = vpop.f32.mrb[0].mxu0
        %v2610 = vadd.f32 %v2079, %v2609
        %v2611 = vpop.f32.mrb[0].mxu0
        %v2612 = vpop.f32.mrb[0].mxu0
        %v2613 = vadd.f32 %v2079, %v2612
        %v2614 = vpop.f32.mrb[0].mxu0
        %2615 = vmatprep.mubr.bf16.mxu0 %v2094
        %2616 = vmatmul.mubr.bf16.gmra.mrb[0].mxu0 %v2093
        %v2617 = vpop.f32.mrb[0].mxu0
        %v2618 = vadd.f32 %v2079, %v2617
        %v2619 = vpop.f32.mrb[0].mxu0
        %v2620 = vpop.f32.mrb[0].mxu0
        %v2621 = vadd.f32 %v2079, %v2620
        %v2622 = vpop.f32.mrb[0].mxu0
        %2623 = vmatprep.mubr.bf16.mxu0 %v2100
        %2624 = vmatmul.mubr.bf16.gmra.mrb[0].mxu0 %v2099
        %v2625 = vpop.f32.mrb[0].mxu0
        %v2626 = vadd.f32 %v2079, %v2625
        %v2627 = vpop.f32.mrb[0].mxu0
        %v2628 = vpop.f32.mrb[0].mxu0
        %v2629 = vadd.f32 %v2079, %v2628
        %v2630 = vpop.f32.mrb[0].mxu0
        %2631 = vdwg.mxu0
        %2632 = vmatprep.subr.bf16.mxu0 0
        %2633 = vmatpush1.bf16.msra.mxu0 %v2439
        %2634 = vmatprep.subr.bf16.mxu0 0
        %2635 = vmatpush1.bf16.msra.mxu0 %v2440
        %2636 = vmatprep.subr.bf16.mxu0 0
        %2637 = vmatpush1.bf16.msra.mxu0 %v2441
        %2638 = vmatprep.subr.bf16.mxu0 0
        %2639 = vmatpush1.bf16.msra.mxu0 %v2442
        %2640 = vmatprep.subr.bf16.mxu0 0
        %2641 = vmatpush1.bf16.msra.mxu0 %v2443
        %2642 = vmatprep.subr.bf16.mxu0 0
        %2643 = vmatpush1.bf16.msra.mxu0 %v2444
        %2644 = vmatprep.subr.bf16.mxu0 0
        %2645 = vmatpush1.bf16.msra.mxu0 %v2445
        %2646 = vmatprep.subr.bf16.mxu0 0
        %2647 = vmatpush1.bf16.msra.mxu0 %v2446
        %2648 = vmatprep.subr.bf16.mxu0 0
        %2649 = vmatpush1.bf16.msra.mxu0 %v2447
        %2650 = vmatprep.subr.bf16.mxu0 0
        %2651 = vmatpush1.bf16.msra.mxu0 %v2448
        %2652 = vmatprep.subr.bf16.mxu0 0
        %2653 = vmatpush1.bf16.msra.mxu0 %v2449
        %2654 = vmatprep.subr.bf16.mxu0 0
        %2655 = vmatpush1.bf16.msra.mxu0 %v2450
        %2656 = vmatprep.subr.bf16.mxu0 0
        %2657 = vmatpush1.bf16.msra.mxu0 %v2451
        %2658 = vmatprep.subr.bf16.mxu0 0
        %2659 = vmatpush1.bf16.msra.mxu0 %v2452
        %2660 = vmatprep.subr.bf16.mxu0 0
        %2661 = vmatpush1.bf16.msra.mxu0 %v2453
        %2662 = vmatprep.subr.bf16.mxu0 0
        %2663 = vmatpush1.bf16.msra.mxu0 %v2454
        %2664 = vmatprep.mubr.bf16.mxu0 %v2084
        %2665 = vmatmul.mubr.bf16.gmra.mrb[0].mxu0 %v2083
        %v2666 = vpop.f32.mrb[0].mxu0
        %v2667 = vadd.f32 %v2602, %v2666
        %v2668 = vpop.f32.mrb[0].mxu0
        %v2669 = vpop.f32.mrb[0].mxu0
        %v2670 = vadd.f32 %v2605, %v2669
        %v2671 = vpop.f32.mrb[0].mxu0
        %2672 = vmatprep.mubr.bf16.mxu0 %v2090
        %2673 = vmatmul.mubr.bf16.gmra.mrb[0].mxu0 %v2089
        %v2674 = vpop.f32.mrb[0].mxu0
        %v2675 = vadd.f32 %v2610, %v2674
        %v2676 = vpop.f32.mrb[0].mxu0
        %v2677 = vpop.f32.mrb[0].mxu0
        %v2678 = vadd.f32 %v2613, %v2677
        %v2679 = vpop.f32.mrb[0].mxu0
        %2680 = vmatprep.mubr.bf16.mxu0 %v2096
        %2681 = vmatmul.mubr.bf16.gmra.mrb[0].mxu0 %v2095
        %v2682 = vpop.f32.mrb[0].mxu0
        %v2683 = vadd.f32 %v2618, %v2682
        %v2684 = vpop.f32.mrb[0].mxu0
        %v2685 = vpop.f32.mrb[0].mxu0
        %v2686 = vadd.f32 %v2621, %v2685
        %v2687 = vpop.f32.mrb[0].mxu0
        %2688 = vmatprep.mubr.bf16.mxu0 %v2102
        %2689 = vmatmul.mubr.bf16.gmra.mrb[0].mxu0 %v2101
        %v2690 = vpop.f32.mrb[0].mxu0
        %v2691 = vadd.f32 %v2626, %v2690
        %v2692 = vpop.f32.mrb[0].mxu0
        %v2693 = vpop.f32.mrb[0].mxu0
        %v2694 = vadd.f32 %v2629, %v2693
        %v2695 = vpop.f32.mrb[0].mxu0
        %2696 = vdwg.mxu0
        %2697 = vmatprep.subr.bf16.mxu0 0
        %2698 = vmatpush1.bf16.msra.mxu0 %v2455
        %2699 = vmatprep.subr.bf16.mxu0 0
        %2700 = vmatpush1.bf16.msra.mxu0 %v2456
        %2701 = vmatprep.subr.bf16.mxu0 0
        %2702 = vmatpush1.bf16.msra.mxu0 %v2457
        %2703 = vmatprep.subr.bf16.mxu0 0
        %2704 = vmatpush1.bf16.msra.mxu0 %v2458
        %2705 = vmatprep.subr.bf16.mxu0 0
        %2706 = vmatpush1.bf16.msra.mxu0 %v2459
        %2707 = vmatprep.subr.bf16.mxu0 0
        %2708 = vmatpush1.bf16.msra.mxu0 %v2460
        %2709 = vmatprep.subr.bf16.mxu0 0
        %2710 = vmatpush1.bf16.msra.mxu0 %v2461
        %2711 = vmatprep.subr.bf16.mxu0 0
        %2712 = vmatpush1.bf16.msra.mxu0 %v2462
        %2713 = vmatprep.subr.bf16.mxu0 0
        %2714 = vmatpush1.bf16.msra.mxu0 %v2463
        %2715 = vmatprep.subr.bf16.mxu0 0
        %2716 = vmatpush1.bf16.msra.mxu0 %v2464
        %2717 = vmatprep.subr.bf16.mxu0 0
        %2718 = vmatpush1.bf16.msra.mxu0 %v2465
        %2719 = vmatprep.subr.bf16.mxu0 0
        %2720 = vmatpush1.bf16.msra.mxu0 %v2466
        %2721 = vmatprep.subr.bf16.mxu0 0
        %2722 = vmatpush1.bf16.msra.mxu0 %v2467
        %2723 = vmatprep.subr.bf16.mxu0 0
        %2724 = vmatpush1.bf16.msra.mxu0 %v2468
        %2725 = vmatprep.subr.bf16.mxu0 0
        %2726 = vmatpush1.bf16.msra.mxu0 %v2469
        %2727 = vmatprep.subr.bf16.mxu0 0
        %2728 = vmatpush1.bf16.msra.mxu0 %v2470
        %2729 = vmatprep.mubr.bf16.mxu0 %v2086
        %2730 = vmatmul.mubr.bf16.gmra.mrb[0].mxu0 %v2085
        %v2731 = vpop.f32.mrb[0].mxu0
        %v2732 = vadd.f32 %v2667, %v2731
        %v2733 = vpop.f32.mrb[0].mxu0
        %v2734 = vpop.f32.mrb[0].mxu0
        %v2735 = vadd.f32 %v2670, %v2734
        %v2736 = vpop.f32.mrb[0].mxu0
        %2737 = vmatprep.mubr.bf16.mxu0 %v2092
        %2738 = vmatmul.mubr.bf16.gmra.mrb[0].mxu0 %v2091
        %v2739 = vpop.f32.mrb[0].mxu0
        %v2740 = vadd.f32 %v2675, %v2739
        %v2741 = vpop.f32.mrb[0].mxu0
        %v2742 = vpop.f32.mrb[0].mxu0
        %v2743 = vadd.f32 %v2678, %v2742
        %v2744 = vpop.f32.mrb[0].mxu0
        %2745 = vmatprep.mubr.bf16.mxu0 %v2098
        %2746 = vmatmul.mubr.bf16.gmra.mrb[0].mxu0 %v2097
        %v2747 = vpop.f32.mrb[0].mxu0
        %v2748 = vadd.f32 %v2683, %v2747
        %v2749 = vpop.f32.mrb[0].mxu0
        %v2750 = vpop.f32.mrb[0].mxu0
        %v2751 = vadd.f32 %v2686, %v2750
        %v2752 = vpop.f32.mrb[0].mxu0
        %2753 = vmatprep.mubr.bf16.mxu0 %v2104
        %2754 = vmatmul.mubr.bf16.gmra.mrb[0].mxu0 %v2103
        %v2755 = vpop.f32.mrb[0].mxu0
        %v2756 = vadd.f32 %v2691, %v2755
        %v2757 = vpop.f32.mrb[0].mxu0
        %v2758 = vpop.f32.mrb[0].mxu0
        %v2759 = vadd.f32 %v2694, %v2758
        %v2760 = vpop.f32.mrb[0].mxu0
        %2761 = vdwg.mxu0
        %2762 = vmatprep.subr.bf16.mxu0 0
        %2763 = vmatpush1.bf16.msra.mxu0 %v2471
        %2764 = vmatprep.subr.bf16.mxu0 0
        %2765 = vmatpush1.bf16.msra.mxu0 %v2472
        %2766 = vmatprep.subr.bf16.mxu0 0
        %2767 = vmatpush1.bf16.msra.mxu0 %v2473
        %2768 = vmatprep.subr.bf16.mxu0 0
        %2769 = vmatpush1.bf16.msra.mxu0 %v2474
        %2770 = vmatprep.subr.bf16.mxu0 0
        %2771 = vmatpush1.bf16.msra.mxu0 %v2475
        %2772 = vmatprep.subr.bf16.mxu0 0
        %2773 = vmatpush1.bf16.msra.mxu0 %v2476
        %2774 = vmatprep.subr.bf16.mxu0 0
        %2775 = vmatpush1.bf16.msra.mxu0 %v2477
        %2776 = vmatprep.subr.bf16.mxu0 0
        %2777 = vmatpush1.bf16.msra.mxu0 %v2478
        %2778 = vmatprep.subr.bf16.mxu0 0
        %2779 = vmatpush1.bf16.msra.mxu0 %v2479
        %2780 = vmatprep.subr.bf16.mxu0 0
        %2781 = vmatpush1.bf16.msra.mxu0 %v2480
        %2782 = vmatprep.subr.bf16.mxu0 0
        %2783 = vmatpush1.bf16.msra.mxu0 %v2481
        %2784 = vmatprep.subr.bf16.mxu0 0
        %2785 = vmatpush1.bf16.msra.mxu0 %v2482
        %2786 = vmatprep.subr.bf16.mxu0 0
        %2787 = vmatpush1.bf16.msra.mxu0 %v2483
        %2788 = vmatprep.subr.bf16.mxu0 0
        %2789 = vmatpush1.bf16.msra.mxu0 %v2484
        %2790 = vmatprep.subr.bf16.mxu0 0
        %2791 = vmatpush1.bf16.msra.mxu0 %v2485
        %2792 = vmatprep.subr.bf16.mxu0 0
        %2793 = vmatpush1.bf16.msra.mxu0 %v2486
        %2794 = vmatprep.mubr.bf16.mxu0 %v2088
        %2795 = vmatmul.mubr.bf16.gmra.mrb[0].mxu0 %v2087
        %v2796 = vpop.f32.mrb[0].mxu0
        %v2797 = vadd.f32 %v2732, %v2796
        %v2798 = vpop.f32.mrb[0].mxu0
        %v2799 = vpop.f32.mrb[0].mxu0
        %v2800 = vadd.f32 %v2735, %v2799
        %v2801 = vpop.f32.mrb[0].mxu0
        %2802 = vmatprep.mubr.bf16.mxu0 %v2094
        %2803 = vmatmul.mubr.bf16.gmra.mrb[0].mxu0 %v2093
        %v2804 = vpop.f32.mrb[0].mxu0
        %v2805 = vadd.f32 %v2740, %v2804
        %v2806 = vpop.f32.mrb[0].mxu0
        %v2807 = vpop.f32.mrb[0].mxu0
        %v2808 = vadd.f32 %v2743, %v2807
        %v2809 = vpop.f32.mrb[0].mxu0
        %2810 = vmatprep.mubr.bf16.mxu0 %v2100
        %2811 = vmatmul.mubr.bf16.gmra.mrb[0].mxu0 %v2099
        %v2812 = vpop.f32.mrb[0].mxu0
        %v2813 = vadd.f32 %v2748, %v2812
        %v2814 = vpop.f32.mrb[0].mxu0
        %v2815 = vpop.f32.mrb[0].mxu0
        %v2816 = vadd.f32 %v2751, %v2815
        %v2817 = vpop.f32.mrb[0].mxu0
        %2818 = vmatprep.mubr.bf16.mxu0 %v2106
        %2819 = vmatmul.mubr.bf16.gmra.mrb[0].mxu0 %v2105
        %v2820 = vpop.f32.mrb[0].mxu0
        %v2821 = vadd.f32 %v2756, %v2820
        %v2822 = vpop.f32.mrb[0].mxu0
        %v2823 = vpop.f32.mrb[0].mxu0
        %v2824 = vadd.f32 %v2759, %v2823
        %v2825 = vpop.f32.mrb[0].mxu0
        %2826 = vdwg.mxu0
        %2827 = vmatprep.subr.bf16.mxu0 0
        %2828 = vmatpush1.bf16.msra.mxu0 %v2487
        %2829 = vmatprep.subr.bf16.mxu0 0
        %2830 = vmatpush1.bf16.msra.mxu0 %v2488
        %2831 = vmatprep.subr.bf16.mxu0 0
        %2832 = vmatpush1.bf16.msra.mxu0 %v2489
        %2833 = vmatprep.subr.bf16.mxu0 0
        %2834 = vmatpush1.bf16.msra.mxu0 %v2490
        %2835 = vmatprep.subr.bf16.mxu0 0
        %2836 = vmatpush1.bf16.msra.mxu0 %v2491
        %2837 = vmatprep.subr.bf16.mxu0 0
        %2838 = vmatpush1.bf16.msra.mxu0 %v2492
        %2839 = vmatprep.subr.bf16.mxu0 0
        %2840 = vmatpush1.bf16.msra.mxu0 %v2493
        %2841 = vmatprep.subr.bf16.mxu0 0
        %2842 = vmatpush1.bf16.msra.mxu0 %v2494
        %2843 = vmatprep.subr.bf16.mxu0 0
        %2844 = vmatpush1.bf16.msra.mxu0 0
        %2845 = vmatprep.subr.bf16.mxu0 0
        %2846 = vmatpush1.bf16.msra.mxu0 0
        %2847 = vmatprep.subr.bf16.mxu0 0
        %2848 = vmatpush1.bf16.msra.mxu0 0
        %2849 = vmatprep.subr.bf16.mxu0 0
        %2850 = vmatpush1.bf16.msra.mxu0 0
        %2851 = vmatprep.subr.bf16.mxu0 0
        %2852 = vmatpush1.bf16.msra.mxu0 0
        %2853 = vmatprep.subr.bf16.mxu0 0
        %2854 = vmatpush1.bf16.msra.mxu0 0
        %2855 = vmatprep.subr.bf16.mxu0 0
        %2856 = vmatpush1.bf16.msra.mxu0 0
        %2857 = vmatprep.subr.bf16.mxu0 0
        %2858 = vmatpush1.bf16.msra.mxu0 0
        %2859 = vmatprep.mubr.bf16.mxu0 0
        %2860 = vmatmul.mubr.bf16.gmra.mrb[0].mxu0 %v2089
        %v2861 = vpop.f32.mrb[0].mxu0
        %v2862 = vadd.f32 %v2797, %v2861
        %v2863 = vpop.f32.mrb[0].mxu0
        %v2864 = vpop.f32.mrb[0].mxu0
        %v2865 = vadd.f32 %v2800, %v2864
        %v2866 = vpop.f32.mrb[0].mxu0
        %2867 = vmatprep.mubr.bf16.mxu0 0
        %2868 = vmatmul.mubr.bf16.gmra.mrb[0].mxu0 %v2095
        %v2869 = vpop.f32.mrb[0].mxu0
        %v2870 = vadd.f32 %v2805, %v2869
        %v2871 = vpop.f32.mrb[0].mxu0
        %v2872 = vpop.f32.mrb[0].mxu0
        %v2873 = vadd.f32 %v2808, %v2872
        %v2874 = vpop.f32.mrb[0].mxu0
        %2875 = vmatprep.mubr.bf16.mxu0 0
        %2876 = vmatmul.mubr.bf16.gmra.mrb[0].mxu0 %v2101
        %v2877 = vpop.f32.mrb[0].mxu0
        %v2878 = vadd.f32 %v2813, %v2877
        %v2879 = vpop.f32.mrb[0].mxu0
        %v2880 = vpop.f32.mrb[0].mxu0
        %v2881 = vadd.f32 %v2816, %v2880
        %v2882 = vpop.f32.mrb[0].mxu0
        %2883 = vmatprep.mubr.bf16.mxu0 0
        %2884 = vmatmul.mubr.bf16.gmra.mrb[0].mxu0 %v2107
        %v2885 = vpop.f32.mrb[0].mxu0
        %v2886 = vadd.f32 %v2821, %v2885
        %v2887 = vpop.f32.mrb[0].mxu0
        %v2888 = vpop.f32.mrb[0].mxu0
        %v2889 = vadd.f32 %v2824, %v2888
        %v2890 = vpop.f32.mrb[0].mxu0
        %2891 = vdwg.mxu0
        %v2892 = vld [vmem:[%s5] sm:$0xf]
        %v2893 = vld [vmem:[%s5 + $0x4] sm:$0xf]
        %v2894 = vld [vmem:[%s5 + $0x8] sm:$0xf]
        %v2895 = vld [vmem:[%s5 + $0xc] sm:$0xf]
        %v2896 = vld [vmem:[%s5 + $0x10] sm:$0xf]
        %v2897 = vld [vmem:[%s5 + $0x14] sm:$0xf]
        %v2898 = vld [vmem:[%s5 + $0x18] sm:$0xf]
        %v2899 = vld [vmem:[%s5 + $0x1c] sm:$0xf]
        %v2900 = vld [vmem:[%s5 + $0x20] sm:$0xf]
        %v2901 = vld [vmem:[%s5 + $0x24] sm:$0xf]
        %v2902 = vld [vmem:[%s5 + $0x28] sm:$0xf]
        %v2903 = vld [vmem:[%s5 + $0x2c] sm:$0xf]
        %v2904 = vld [vmem:[%s5 + $0x30] sm:$0xf]
        %v2905 = vld [vmem:[%s5 + $0x34] sm:$0xf]
        %v2906 = vld [vmem:[%s5 + $0x38] sm:$0xf]
        %v2907 = vld [vmem:[%s5 + $0x3c] sm:$0xf]
        %v2908 = vld [vmem:[%s6] sm:$0x1]
        %v2910 = vlaneseq
        %v2911 = vshrl.u32 %v2910, 7
        %v2912 = vsub.s32 0, %v2911
        %v2913 = vrot.slane %v2908, %v2912
        %v2931 = vunpack.c.l.b16 %v2892
        %v2932 = vunpack.c.l.b16 %v2893
        %v2933 = vunpack.c.l.b16 %v2894
        %v2934 = vunpack.c.l.b16 %v2895
        %v2935 = vunpack.c.l.b16 %v2896
        %v2936 = vunpack.c.l.b16 %v2897
        %v2937 = vunpack.c.l.b16 %v2898
        %v2938 = vunpack.c.l.b16 %v2899
        %v2939 = vunpack.c.l.b16 %v2900
        %v2940 = vunpack.c.l.b16 %v2901
        %v2941 = vunpack.c.l.b16 %v2902
        %v2942 = vunpack.c.l.b16 %v2903
        %v2943 = vunpack.c.l.b16 %v2904
        %v2944 = vunpack.c.l.b16 %v2905
        %v2945 = vunpack.c.l.b16 %v2906
        %v2946 = vunpack.c.l.b16 %v2907
        %v2947 = vpack.c.b16 %v2932, %v2931
        %v2948 = vpack.c.b16 %v2934, %v2933
        %v2949 = vpack.c.b16 %v2936, %v2935
        %v2950 = vpack.c.b16 %v2938, %v2937
        %v2951 = vpack.c.b16 %v2940, %v2939
        %v2952 = vpack.c.b16 %v2942, %v2941
        %v2953 = vpack.c.b16 %v2944, %v2943
        %v2954 = vpack.c.b16 %v2946, %v2945
        %2963 = vmatprep.subr.bf16.mxu0 0
        %2964 = vmatpush1.bf16.msra.mxu0 %v2947
        %2965 = vmatprep.subr.bf16.mxu0 0
        %2966 = vmatpush1.bf16.msra.mxu0 %v2948
        %2967 = vmatprep.subr.bf16.mxu0 0
        %2968 = vmatpush1.bf16.msra.mxu0 %v2949
        %2969 = vmatprep.subr.bf16.mxu0 0
        %2970 = vmatpush1.bf16.msra.mxu0 %v2950
        %2971 = vmatprep.subr.bf16.mxu0 0
        %2972 = vmatpush1.bf16.msra.mxu0 %v2951
        %2973 = vmatprep.subr.bf16.mxu0 0
        %2974 = vmatpush1.bf16.msra.mxu0 %v2952
        %2975 = vmatprep.subr.bf16.mxu0 0
        %2976 = vmatpush1.bf16.msra.mxu0 %v2953
        %2977 = vmatprep.subr.bf16.mxu0 0
        %2978 = vmatpush1.bf16.msra.mxu0 %v2954
        %2979 = vmatprep.subr.bf16.mxu0 0
        %2980 = vmatpush1.bf16.msra.mxu0 0
        %2981 = vmatprep.subr.bf16.mxu0 0
        %2982 = vmatpush1.bf16.msra.mxu0 0
        %2983 = vmatprep.subr.bf16.mxu0 0
        %2984 = vmatpush1.bf16.msra.mxu0 0
        %2985 = vmatprep.subr.bf16.mxu0 0
        %2986 = vmatpush1.bf16.msra.mxu0 0
        %2987 = vmatprep.subr.bf16.mxu0 0
        %2988 = vmatpush1.bf16.msra.mxu0 0
        %2989 = vmatprep.subr.bf16.mxu0 0
        %2990 = vmatpush1.bf16.msra.mxu0 0
        %2991 = vmatprep.subr.bf16.mxu0 0
        %2992 = vmatpush1.bf16.msra.mxu0 0
        %2993 = vmatprep.subr.bf16.mxu0 0
        %2994 = vmatpush1.bf16.msra.mxu0 0
        %2995 = vmatprep.mubr.bf16.mxu0 0
        %2996 = vmatmul.mubr.bf16.gmra.mrb[0].mxu0 %v885
        %v2997 = vpop.f32.mrb[0].mxu0
        %v2998 = vadd.f32 %v2913, %v2997
        %v2999 = vpop.f32.mrb[0].mxu0
        %v3000 = vpop.f32.mrb[0].mxu0
        %v3001 = vadd.f32 %v2913, %v3000
        %v3002 = vpop.f32.mrb[0].mxu0
        %3003 = vmatprep.mubr.bf16.mxu0 0
        %3004 = vmatmul.mubr.bf16.gmra.mrb[0].mxu0 %v894
        %v3005 = vpop.f32.mrb[0].mxu0
        %v3006 = vadd.f32 %v2913, %v3005
        %v3007 = vpop.f32.mrb[0].mxu0
        %v3008 = vpop.f32.mrb[0].mxu0
        %v3009 = vadd.f32 %v2913, %v3008
        %v3010 = vpop.f32.mrb[0].mxu0
        %3011 = vmatprep.mubr.bf16.mxu0 0
        %3012 = vmatmul.mubr.bf16.gmra.mrb[0].mxu0 %v903
        %v3013 = vpop.f32.mrb[0].mxu0
        %v3014 = vadd.f32 %v2913, %v3013
        %v3015 = vpop.f32.mrb[0].mxu0
        %v3016 = vpop.f32.mrb[0].mxu0
        %v3017 = vadd.f32 %v2913, %v3016
        %v3018 = vpop.f32.mrb[0].mxu0
        %3019 = vmatprep.mubr.bf16.mxu0 0
        %3020 = vmatmul.mubr.bf16.gmra.mrb[0].mxu0 %v912
        %v3021 = vpop.f32.mrb[0].mxu0
        %v3022 = vadd.f32 %v2913, %v3021
        %v3023 = vpop.f32.mrb[0].mxu0
        %v3024 = vpop.f32.mrb[0].mxu0
        %v3025 = vadd.f32 %v2913, %v3024
        %v3026 = vpop.f32.mrb[0].mxu0
        %3027 = vdwg.mxu0
        %v3028 = vadd.f32 %v2862, %v2998
        %v3029 = vadd.f32 %v2865, %v3001
        %v3030 = vadd.f32 %v2870, %v3006
        %v3031 = vadd.f32 %v2873, %v3009
        %v3032 = vadd.f32 %v2878, %v3014
        %v3033 = vadd.f32 %v2881, %v3017
        %v3034 = vadd.f32 %v2886, %v3022
        %v3035 = vadd.f32 %v2889, %v3025
        %v3036 = vmax.f32 %v3028, 0.0
        %v3037 = vmax.f32 %v3029, 0.0
        %v3038 = vmax.f32 %v3030, 0.0
        %v3039 = vmax.f32 %v3031, 0.0
        %v3040 = vmax.f32 %v3032, 0.0
        %v3041 = vmax.f32 %v3033, 0.0
        %v3042 = vmax.f32 %v3034, 0.0
        %v3043 = vmax.f32 %v3035, 0.0
        %3044 = vst [vmem:[%s286] sm:$0xff] %v3036
        %3045 = vst [vmem:[%s286 + $0x8] sm:$0xff] %v3037
        %3046 = vst [vmem:[%s286 + $0x10] sm:$0xff] %v3038
        %3047 = vst [vmem:[%s286 + $0x18] sm:$0xff] %v3039
        %3048 = vst [vmem:[%s286 + $0x20] sm:$0xff] %v3040
        %3049 = vst [vmem:[%s286 + $0x28] sm:$0xff] %v3041
        %3050 = vst [vmem:[%s286 + $0x30] sm:$0xff] %v3042
        %3051 = vst [vmem:[%s286 + $0x38] sm:$0xff] %v3043
        %s3052 = sand.u32 %s182, 1
        %s3053 = scalar_lea.sflag [#allocation4], %s3052
        %s3054 = sand.u32 %s182, 1
        %s3055 = smul.addr %s3054, 64
        %s3056 = scalar_lea.vmem [#allocation5], %s3055
        // Predicated region
        $region53: #{tpu_custom_call.1} parent=47 // pred_check
          %p3057 = pneg %p192
        $region54: #{tpu_custom_call.1} parent=47 // pred_check_branch
          %3059 = sbr.rel (%p3057) target = $region56
        $region55: #{tpu_custom_call.1} parent=47 // pred_region
          %s3061 = ssub.s32 1024, 1024
          %3062 = vsyncadd %s3053, %s3061
          %s3063 = smul.addr %s22, 8
          %s3064 = smul.addr %s3063, 128
          %s3065 = scalar_lea.hbm %s7, %s3064
          %s3066 = sshll.u32 %s3056, 4
          %s3067 = int_to_ptr.vmem [resolvable:$true] %s3066
          %3072 = dma.vmem_to_hbm [thread:$0]  %s3067, 1024, %s3065, %s3053, 128, 128, 8
        $region56: #{tpu_custom_call.1} parent=47 // pred_fallthru
          _
      $region48: #{tpu_custom_call.1} parent=5 // pred_fallthru
        _
      %p3073 = scmp.le.s32.totalorder 2, %s17
      // Predicated region
      $region57: #{tpu_custom_call.1} parent=5 // pred_check
        %p3074 = pneg %p3073
      $region58: #{tpu_custom_call.1} parent=5 // pred_check_branch
        %3076 = sbr.rel (%p3074) target = $region60
      $region59: #{tpu_custom_call.1} parent=5 // pred_region
        %s3077 = ssub.s32 %s17, 2
        // Predicated region
        $region61: #{tpu_custom_call.1} parent=59 // pred_check
          %p3078 = pneg %p198
        $region62: #{tpu_custom_call.1} parent=59 // pred_check_branch
          %3080 = sbr.rel (%p3078) target = $region64
        $region63: #{tpu_custom_call.1} parent=59 // pred_region
          %s3081 = sand.u32 %s183, 1
          %s3082 = scalar_lea.sflag [#allocation4], %s3081
          %s3083 = sand.u32 %s183, 1
          %s3084 = smul.addr %s3083, 64
          %s3085 = scalar_lea.vmem [#allocation5], %s3084
          %3086 = dma.done %s3082, 1024
        $region64: #{tpu_custom_call.1} parent=59 // pred_fallthru
          _
      $region60: #{tpu_custom_call.1} parent=5 // pred_fallthru
        _
    $region6: #{tpu_custom_call.1} parent=1 // loop_footer
      %s21 = sadd.s32 1, %s17
    $region7: #{tpu_custom_call.1} parent=1 // loop_footer_branch
      %16 = sbr.rel target = $region3
    $region8: #{tpu_custom_call.1} parent=1 // loop_exit
      _
    %3087 = vsyncpa [#allocation3], 1
    %s3088 = scalar_lea.sflag [#allocation3], 1
    %3089 = vsyncpa %s3088, 1
    %3090 = vsyncpa [#allocation4], 1
    %s3091 = scalar_lea.sflag [#allocation4], 1
    %3092 = vsyncpa %s3091, 1

</llo_original>
